<compile_context>
chip_gen: v7x
topology: tpu7x:2x2x1
jax: 0.10.0
libtpu: 0.0.40
codegen_flags: <defaults>
</compile_context>

<pallas_src>
import functools
import math

import jax
import jax.numpy as jnp
from jax.experimental import pallas as pl
from jax.experimental.pallas import tpu as pltpu


# ----------------------------- in-kernel helpers -----------------------------

def _layernorm(x, gamma, beta, eps=1e-5):
    # two-pass (x - mean) form: robust when |mean| >> std on the residual stream
    mean = jnp.mean(x, axis=-1, keepdims=True)
    xc = x - mean
    var = jnp.mean(xc * xc, axis=-1, keepdims=True)
    return xc * jax.lax.rsqrt(var + eps) * gamma + beta


def _attention(ctx_ref, x_q, x_kv, mask_add,
               wq_ref, bq_ref, wk_ref, bk_ref, wv_ref, bv_ref, wf_ref, bf_ref,
               num_heads):
    """One multi-head attention block.

    x_q: (Tq, D) f32 query rows; x_kv: (S, D) f32 key/value source.
    Weights are packed per head: wq/wk (H, D, hk), wv (H, D, hv), biases (H, 1, hk|hv);
    wf stays dense (Dv, D).  Scores use dot_general contracting on the last dims (no f32
    K transpose).  A fori_loop bounds the live (Tq, S) score buffer to one head; each head's
    context lands in ctx_ref[h] (VMEM scratch) and one dense projection follows.
    """
    xq_b = x_q.astype(jnp.bfloat16)     # cast once per stage
    xkv_b = x_kv.astype(jnp.bfloat16)

    def head_body(h, carry):
        # per-head projections: static-shape (D, hd) weight slice, K = D on the MXU
        q_h = jnp.dot(xq_b, wq_ref[h], preferred_element_type=jnp.float32) + bq_ref[h]
        k_h = jnp.dot(xkv_b, wk_ref[h], preferred_element_type=jnp.float32) + bk_ref[h]
        v_h = jnp.dot(xkv_b, wv_ref[h], preferred_element_type=jnp.float32) + bv_ref[h]

        # (Tq, S) scores: contract on head_k (last dim of both) - no K transpose
        s = jax.lax.dot_general(
            q_h.astype(jnp.bfloat16), k_h.astype(jnp.bfloat16),
            dimension_numbers=(((1,), (1,)), ((), ())),
            preferred_element_type=jnp.float32)
        if mask_add is not None:
            s = s + mask_add
        s = s - jnp.max(s, axis=-1, keepdims=True)
        p = jnp.exp(s)                                              # f32 (v5e-safe)
        p = p * pl.reciprocal(jnp.sum(p, axis=-1, keepdims=True), approx=True)

        ctx_ref[h] = jnp.dot(p.astype(jnp.bfloat16), v_h.astype(jnp.bfloat16),
                             preferred_element_type=jnp.float32)    # (Tq, hv)
        return carry

    jax.lax.fori_loop(0, num_heads, head_body, 0)

    # single dense output projection with K = v_dim
    ctx = jnp.concatenate([ctx_ref[h] for h in range(num_heads)], axis=-1)
    return jnp.dot(ctx.astype(jnp.bfloat16), wf_ref[...],
                   preferred_element_type=jnp.float32) + bf_ref[...]


# ------------------------------ fused decoder kernel ------------------------------

def _decoder_body(inp_ref, enc_ref, self_mask, refs, *, num_heads, block_q):
    (wq1, bq1, wk1, bk1, wv1, bv1, wf1, bf1,
     wq2, bq2, wk2, bk2, wv2, bv2, wf2, bf2,
     w1_ref, b1_ref, w2_ref, b2_ref, g_ref, beta_ref,
     out_ref, ctx_ref) = refs

    seq_t = inp_ref.shape[1]
    row0 = pl.multiple_of(pl.program_id(1) * block_q, block_q)

    x_full = inp_ref[0]                               # (T, D) keys/values for self-attn
    x0 = inp_ref[0, pl.ds(row0, block_q), :]          # (block_q, D) query rows of this step
    gamma = g_ref[...]
    beta = beta_ref[...]

    # in-kernel causal mask when no explicit mask was supplied (no (T,T) HBM DMA)
    if self_mask is None:
        rows = row0 + jax.lax.broadcasted_iota(jnp.int32, (block_q, seq_t), 0)
        cols = jax.lax.broadcasted_iota(jnp.int32, (block_q, seq_t), 1)
        self_mask = jnp.where(cols <= rows, 0.0, -1e9).astype(jnp.float32)

    # ---- stage 1: masked self-attention + residual + LN ----
    a1 = _attention(ctx_ref, x0, x_full, self_mask,
                    wq1, bq1, wk1, bk1, wv1, bv1, wf1, bf1, num_heads)
    x1 = _layernorm(x0 + a1, gamma, beta)

    # ---- stage 2: cross-attention over encoder output (no mask) + residual + LN ----
    a2 = _attention(ctx_ref, x1, enc_ref[0], None,
                    wq2, bq2, wk2, bk2, wv2, bv2, wf2, bf2, num_heads)
    x2 = _layernorm(x1 + a2, gamma, beta)

    # ---- stage 3: position-wise FFN + residual + LN (dropout == identity) ----
    h = jnp.dot(x2.astype(jnp.bfloat16), w1_ref[...],
                preferred_element_type=jnp.float32) + b1_ref[...]
    h = jnp.maximum(h, 0.0)
    y = jnp.dot(h.astype(jnp.bfloat16), w2_ref[...],
                preferred_element_type=jnp.float32) + b2_ref[...]
    out_ref[0] = _layernorm(x2 + y, gamma, beta)


def _decoder_kernel_causal(inp_ref, enc_ref, *refs, num_heads, block_q):
    _decoder_body(inp_ref, enc_ref, None, refs, num_heads=num_heads, block_q=block_q)


def _decoder_kernel_masked(inp_ref, enc_ref, mask_ref, *refs, num_heads, block_q):
    _decoder_body(inp_ref, enc_ref, mask_ref[...], refs,
                  num_heads=num_heads, block_q=block_q)


# ------------------------------ host-side wrapper ------------------------------

def _pack_mha(p, num_heads):
    """Pack a PyTorch-style MHA param dict into per-head MXU-friendly layouts."""
    d_in, d_k = p["wq"].shape
    d_v = p["wv"].shape[1]
    hk, hv = d_k // num_heads, d_v // num_heads
    scale = 1.0 / math.sqrt(hk)          # folded into Wq / bq (replaces per-score scaling)

    def heads_w(w, hd):                  # (D, H*hd) -> (H, D, hd) bf16
        return jnp.transpose(w.reshape(d_in, num_heads, hd), (1, 0, 2)).astype(jnp.bfloat16)

    def heads_b(b, hd):                  # (1, H*hd) -> (H, 1, hd) f32
        return jnp.transpose(b.reshape(1, num_heads, hd), (1, 0, 2))

    return (heads_w(p["wq"] * scale, hk), heads_b(p["bq"] * scale, hk),
            heads_w(p["wk"], hk),         heads_b(p["bk"], hk),
            heads_w(p["wv"], hv),         heads_b(p["bv"], hv),
            p["wf"].astype(jnp.bfloat16), p["bf"])


def _vmem_limit_bytes():
    # ~56 MiB on v7x (64 MiB physical), capped at ~100 MiB on v5e/v6e (128 MiB physical);
    # both are well above the 16/32 MiB scoped defaults.
    try:
        cap = pltpu.get_tpu_info().vmem_capacity_bytes
    except Exception:
        cap = 128 * 1024 * 1024
    return int(min(cap - cap // 8, 100 * 1024 * 1024))


def _const_spec(a):
    nd = a.ndim
    return pl.BlockSpec(a.shape, lambda b, q: (0,) * nd)


def decoder_layer(inp, enc_inp, mask, params, num_heads, *, block_q=None):
    """Fused DecoderLayer forward. mask=None -> causal mask generated in-kernel."""
    B, T, D = inp.shape
    S = enc_inp.shape[1]
    head_v = params["mha1"]["wv"].shape[1] // num_heads

    # q-block tile: >=256 keeps the QK^T M-dim filled on v6e/v7x (>=128 suffices on v5e);
    # fall back to the full sequence when it is already small / not tileable.
    if block_q is None:
        block_q = min(T, 256)
    if T % block_q != 0 or (block_q % 8 != 0 and block_q != T):
        block_q = T
    num_q = T // block_q

    ff = params["ffn"]
    weights = (_pack_mha(params["mha1"], num_heads)
               + _pack_mha(params["mha2"], num_heads)
               + (ff["w1"].astype(jnp.bfloat16), ff["b1"],
                  ff["w2"].astype(jnp.bfloat16), ff["b2"],
                  params["norm_g"], params["norm_b"]))

    in_specs = [pl.BlockSpec((1, T, D), lambda b, q: (b, 0, 0)),   # full seq (K/V source)
                pl.BlockSpec((1, S, D), lambda b, q: (b, 0, 0))]   # encoder output
    args = [inp, enc_inp]
    if mask is not None:
        mask = mask[:T].astype(jnp.float32)                        # == mask[:num_tokens2]
        in_specs.append(pl.BlockSpec((block_q, mask.shape[1]), lambda b, q: (q, 0)))
        args.append(mask)
        kernel = _decoder_kernel_masked
    else:
        kernel = _decoder_kernel_causal                            # causal mask built in-kernel
    # TODO(synk): at production shapes mark these constant-index weight specs with
    # pipeline_mode=pl.Buffered(1) so they are not double-buffered.
    in_specs += [_const_spec(w) for w in weights]
    args += list(weights)

    return pl.pallas_call(
        functools.partial(kernel, num_heads=num_heads, block_q=block_q),
        out_shape=jax.ShapeDtypeStruct((B, T, D), jnp.float32),
        grid=(B, num_q),
        in_specs=in_specs,
        out_specs=pl.BlockSpec((1, block_q, D), lambda b, q: (b, q, 0)),
        scratch_shapes=[pltpu.VMEM((num_heads, block_q, head_v), jnp.float32)],
        compiler_params=pltpu.CompilerParams(
            dimension_semantics=("parallel", "parallel"),
            vmem_limit_bytes=_vmem_limit_bytes()),
    )(*args)


# -------------------------------- pure-JAX reference -----------------------------------

def mha_ref(x1, x2, mask, p, num_heads):
    q = x2 @ p["wq"] + p["bq"][0]
    k = x1 @ p["wk"] + p["bk"][0]
    v = x1 @ p["wv"] + p["bv"][0]
    B1, T1, Dk = k.shape
    B2, T2, _ = q.shape
    Dv = v.shape[-1]
    hk, hv = Dk // num_heads, Dv // num_heads
    q = q.reshape(B2, T2, num_heads, hk).transpose(0, 2, 1, 3)
    k = k.reshape(B1, T1, num_heads, hk).transpose(0, 2, 1, 3)
    v = v.reshape(B1, T1, num_heads, hv).transpose(0, 2, 1, 3)
    s = q @ jnp.swapaxes(k, -2, -1) / math.sqrt(hk) + mask
    a = jax.nn.softmax(s, axis=-1)
    ctx = (a @ v).transpose(0, 2, 1, 3).reshape(B2, T2, Dv)
    return ctx @ p["wf"] + p["bf"][0]


def ln_ref(x, g, b, eps=1e-5):
    mean = x.mean(-1, keepdims=True)
    var = ((x - mean) ** 2).mean(-1, keepdims=True)
    return (x - mean) / jnp.sqrt(var + eps) * g + b


def decoder_layer_ref(inp, enc_inp, mask, params, num_heads):
    g, b = params["norm_g"], params["norm_b"]
    x = ln_ref(inp + mha_ref(inp, inp, mask, params["mha1"], num_heads), g, b)
    x = ln_ref(x + mha_ref(enc_inp, x, 0.0, params["mha2"], num_heads), g, b)
    p = params["ffn"]
    ffo = jnp.maximum(x @ p["w1"] + p["b1"][0], 0.0) @ p["w2"] + p["b2"][0]
    return ln_ref(x + ffo, g, b)


# ---------------------------------- params ------------------------------------

def init_linear(key, in_dim, out_dim):
    kw, kb = jax.random.split(key)
    bound = 1.0 / math.sqrt(in_dim)
    w = jax.random.uniform(kw, (in_dim, out_dim), jnp.float32, -bound, bound)
    b = jax.random.uniform(kb, (1, out_dim), jnp.float32, -bound, bound)
    return w, b


def init_mha(key, main_dim):
    kq, kk, kv, kf = jax.random.split(key, 4)
    wq, bq = init_linear(kq, main_dim, main_dim)
    wk, bk = init_linear(kk, main_dim, main_dim)
    wv, bv = init_linear(kv, main_dim, main_dim)
    wf, bf = init_linear(kf, main_dim, main_dim)
    return dict(wq=wq, bq=bq, wk=wk, bk=bk, wv=wv, bv=bv, wf=wf, bf=bf)


def init_params(key, main_dim, ff_dim):
    k1, k2, k3, k4 = jax.random.split(key, 4)
    w1, b1 = init_linear(k3, main_dim, ff_dim)
    w2, b2 = init_linear(k4, ff_dim, main_dim)
    return dict(
        mha1=init_mha(k1, main_dim),
        mha2=init_mha(k2, main_dim),
        ffn=dict(w1=w1, b1=b1, w2=w2, b2=b2),
        norm_g=jnp.ones((1, main_dim), jnp.float32),
        norm_b=jnp.zeros((1, main_dim), jnp.float32),
    )


# ----------------------------------- main --------------------------------------

if __name__ == "__main__":
    B, T, S, D, H, FF = 2, 16, 8, 32, 4, 64
    BLOCK_Q = 8    # exercises the (batch, q-block) grid (2 q-blocks per batch)

    key = jax.random.PRNGKey(0)
    k_in, k_enc, k_par = jax.random.split(key, 3)
    inp = jax.random.normal(k_in, (B, T, D), jnp.float32)
    enc_inp = jax.random.normal(k_enc, (B, S, D), jnp.float32)
    # causal additive mask, shape (T, T): 0 on/below diag, -1e9 above
    mask = jnp.where(jnp.tril(jnp.ones((T, T), jnp.bool_)), 0.0, -1e9).astype(jnp.float32)

    params = init_params(k_par, D, FF)

    # path 1: causal mask generated in-kernel (no mask DMA)
    out_causal = jax.block_until_ready(
        decoder_layer(inp, enc_inp, None, params, H, block_q=BLOCK_Q))
    # path 2: explicit additive mask input (spec-faithful interface)
    out_masked = jax.block_until_ready(
        decoder_layer(inp, enc_inp, mask, params, H, block_q=BLOCK_Q))

    ref = decoder_layer_ref(inp, enc_inp, mask, params, H)
    err = max(float(jnp.max(jnp.abs(out_causal - ref))),
              float(jnp.max(jnp.abs(out_masked - ref))))
    # bf16 MXU operands (f32 accumulation) + approx softmax reciprocal vs. f32 reference
    assert err < 0.075, f"max abs err = {err}"

    print("KERNEL_OK")
</pallas_src>

<mosaic_0001>
module attributes {stable_mosaic.version = 11 : i64} {
  func.func @_decoder_kernel_causal(%arg0: i32, %arg1: i32, %arg2: memref<1x16x32xf32, #tpu.memory_space<vmem>>, %arg3: memref<1x8x32xf32, #tpu.memory_space<vmem>>, %arg4: memref<4x32x8xbf16, #tpu.memory_space<vmem>>, %arg5: memref<4x1x8xf32, #tpu.memory_space<vmem>>, %arg6: memref<4x32x8xbf16, #tpu.memory_space<vmem>>, %arg7: memref<4x1x8xf32, #tpu.memory_space<vmem>>, %arg8: memref<4x32x8xbf16, #tpu.memory_space<vmem>>, %arg9: memref<4x1x8xf32, #tpu.memory_space<vmem>>, %arg10: memref<32x32xbf16, #tpu.memory_space<vmem>>, %arg11: memref<1x32xf32, #tpu.memory_space<vmem>>, %arg12: memref<4x32x8xbf16, #tpu.memory_space<vmem>>, %arg13: memref<4x1x8xf32, #tpu.memory_space<vmem>>, %arg14: memref<4x32x8xbf16, #tpu.memory_space<vmem>>, %arg15: memref<4x1x8xf32, #tpu.memory_space<vmem>>, %arg16: memref<4x32x8xbf16, #tpu.memory_space<vmem>>, %arg17: memref<4x1x8xf32, #tpu.memory_space<vmem>>, %arg18: memref<32x32xbf16, #tpu.memory_space<vmem>>, %arg19: memref<1x32xf32, #tpu.memory_space<vmem>>, %arg20: memref<32x64xbf16, #tpu.memory_space<vmem>>, %arg21: memref<1x64xf32, #tpu.memory_space<vmem>>, %arg22: memref<64x32xbf16, #tpu.memory_space<vmem>>, %arg23: memref<1x32xf32, #tpu.memory_space<vmem>>, %arg24: memref<1x32xf32, #tpu.memory_space<vmem>>, %arg25: memref<1x32xf32, #tpu.memory_space<vmem>>, %arg26: memref<1x8x32xf32, #tpu.memory_space<vmem>>, %arg27: memref<4x8x8xf32, #tpu.memory_space<vmem>>) attributes {dimension_semantics = [#tpu.dimension_semantics<parallel>, #tpu.dimension_semantics<parallel>], iteration_bounds = array<i64: 2, 2>, scalar_prefetch = 0 : i64, scratch_operands = 1 : i64, tpu.core_type = #tpu.core_type<tc>, window_params = [{transform_indices = @transform_0, window_bounds = array<i64: 1, 16, 32>}, {transform_indices = @transform_1, window_bounds = array<i64: 1, 8, 32>}, {pipeline_mode = #tpu.pipeline_mode<synchronous>, transform_indices = @transform_2, window_bounds = array<i64: 4, 32, 8>}, {pipeline_mode = #tpu.pipeline_mode<synchronous>, transform_indices = @transform_3, window_bounds = array<i64: 4, 1, 8>}, {pipeline_mode = #tpu.pipeline_mode<synchronous>, transform_indices = @transform_4, window_bounds = array<i64: 4, 32, 8>}, {pipeline_mode = #tpu.pipeline_mode<synchronous>, transform_indices = @transform_5, window_bounds = array<i64: 4, 1, 8>}, {pipeline_mode = #tpu.pipeline_mode<synchronous>, transform_indices = @transform_6, window_bounds = array<i64: 4, 32, 8>}, {pipeline_mode = #tpu.pipeline_mode<synchronous>, transform_indices = @transform_7, window_bounds = array<i64: 4, 1, 8>}, {pipeline_mode = #tpu.pipeline_mode<synchronous>, transform_indices = @transform_8, window_bounds = array<i64: 32, 32>}, {pipeline_mode = #tpu.pipeline_mode<synchronous>, transform_indices = @transform_9, window_bounds = array<i64: 1, 32>}, {pipeline_mode = #tpu.pipeline_mode<synchronous>, transform_indices = @transform_10, window_bounds = array<i64: 4, 32, 8>}, {pipeline_mode = #tpu.pipeline_mode<synchronous>, transform_indices = @transform_11, window_bounds = array<i64: 4, 1, 8>}, {pipeline_mode = #tpu.pipeline_mode<synchronous>, transform_indices = @transform_12, window_bounds = array<i64: 4, 32, 8>}, {pipeline_mode = #tpu.pipeline_mode<synchronous>, transform_indices = @transform_13, window_bounds = array<i64: 4, 1, 8>}, {pipeline_mode = #tpu.pipeline_mode<synchronous>, transform_indices = @transform_14, window_bounds = array<i64: 4, 32, 8>}, {pipeline_mode = #tpu.pipeline_mode<synchronous>, transform_indices = @transform_15, window_bounds = array<i64: 4, 1, 8>}, {pipeline_mode = #tpu.pipeline_mode<synchronous>, transform_indices = @transform_16, window_bounds = array<i64: 32, 32>}, {pipeline_mode = #tpu.pipeline_mode<synchronous>, transform_indices = @transform_17, window_bounds = array<i64: 1, 32>}, {pipeline_mode = #tpu.pipeline_mode<synchronous>, transform_indices = @transform_18, window_bounds = array<i64: 32, 64>}, {pipeline_mode = #tpu.pipeline_mode<synchronous>, transform_indices = @transform_19, window_bounds = array<i64: 1, 64>}, {pipeline_mode = #tpu.pipeline_mode<synchronous>, transform_indices = @transform_20, window_bounds = array<i64: 64, 32>}, {pipeline_mode = #tpu.pipeline_mode<synchronous>, transform_indices = @transform_21, window_bounds = array<i64: 1, 32>}, {pipeline_mode = #tpu.pipeline_mode<synchronous>, transform_indices = @transform_22, window_bounds = array<i64: 1, 32>}, {pipeline_mode = #tpu.pipeline_mode<synchronous>, transform_indices = @transform_23, window_bounds = array<i64: 1, 32>}, {transform_indices = @transform_24, window_bounds = array<i64: 1, 8, 32>}]} {
    %c8_i32 = arith.constant 8 : i32
    %0 = arith.muli %arg1, %c8_i32 : i32
    %1 = tpu.assume_multiple %0, 8 : i32
    %c0 = arith.constant 0 : index
    %c0_0 = arith.constant 0 : index
    %c0_1 = arith.constant 0 : index
    %2 = vector.load %arg2[%c0, %c0_0, %c0_1] : memref<1x16x32xf32, #tpu.memory_space<vmem>>, vector<1x16x32xf32>
    %3 = vector.shape_cast %2 : vector<1x16x32xf32> to vector<16x32xf32>
    %c0_2 = arith.constant 0 : index
    %4 = arith.index_cast %1 : i32 to index
    %c0_3 = arith.constant 0 : index
    %5 = vector.load %arg2[%c0_2, %4, %c0_3] : memref<1x16x32xf32, #tpu.memory_space<vmem>>, vector<1x8x32xf32>
    %6 = vector.shape_cast %5 : vector<1x8x32xf32> to vector<8x32xf32>
    %c0_4 = arith.constant 0 : index
    %c0_5 = arith.constant 0 : index
    %7 = vector.load %arg24[%c0_4, %c0_5] : memref<1x32xf32, #tpu.memory_space<vmem>>, vector<1x32xf32>
    %c0_6 = arith.constant 0 : index
    %c0_7 = arith.constant 0 : index
    %8 = vector.load %arg25[%c0_6, %c0_7] : memref<1x32xf32, #tpu.memory_space<vmem>>, vector<1x32xf32>
    %9 = tpu.iota {dimensions = array<i32: 0>} : vector<8x16xi32>
    %10 = vector.broadcast %1 : i32 to vector<8x16xi32>
    %11 = arith.addi %10, %9 : vector<8x16xi32>
    %12 = tpu.iota {dimensions = array<i32: 1>} : vector<8x16xi32>
    %13 = arith.cmpi sle, %12, %11 : vector<8x16xi32>
    %cst = arith.constant 0.000000e+00 : f32
    %cst_8 = arith.constant -1.000000e+09 : f32
    %14 = vector.broadcast %cst : f32 to vector<8x16xf32>
    %15 = vector.broadcast %cst_8 : f32 to vector<8x16xf32>
    %16 = arith.select %13, %14, %15 : vector<8x16xi1>, vector<8x16xf32>
    %17 = arith.truncf %6 : vector<8x32xf32> to vector<8x32xbf16>
    %18 = arith.truncf %3 : vector<16x32xf32> to vector<16x32xbf16>
    %c0_i32 = arith.constant 0 : i32
    %c4_i32 = arith.constant 4 : i32
    %19 = arith.addi %c0_i32, %c4_i32 : i32
    %c1_i32 = arith.constant 1 : i32
    scf.for %arg28 = %c0_i32 to %19 step %c1_i32  : i32 {
      %135 = arith.index_cast %arg28 : i32 to index
      %c0_77 = arith.constant 0 : index
      %c0_78 = arith.constant 0 : index
      %136 = vector.load %arg4[%135, %c0_77, %c0_78] : memref<4x32x8xbf16, #tpu.memory_space<vmem>>, vector<1x32x8xbf16>
      %137 = vector.shape_cast %136 : vector<1x32x8xbf16> to vector<32x8xbf16>
      %cst_79 = arith.constant dense<0.000000e+00> : vector<8x8xf32>
      %138 = tpu.matmul %17, %137, %cst_79 {dimension_numbers = #tpu.dot_dimension_numbers<[1], [0], [0], [1], [0, 0, 1, 1], [], []>} : vector<8x32xbf16>, vector<32x8xbf16>, vector<8x8xf32> -> vector<8x8xf32>
      %139 = arith.index_cast %arg28 : i32 to index
      %c0_80 = arith.constant 0 : index
      %c0_81 = arith.constant 0 : index
      %140 = vector.load %arg5[%139, %c0_80, %c0_81] : memref<4x1x8xf32, #tpu.memory_space<vmem>>, vector<1x1x8xf32>
      %141 = vector.shape_cast %140 : vector<1x1x8xf32> to vector<1x8xf32>
      %142 = vector.broadcast %141 : vector<1x8xf32> to vector<8x8xf32>
      %143 = arith.addf %138, %142 : vector<8x8xf32>
      %144 = arith.index_cast %arg28 : i32 to index
      %c0_82 = arith.constant 0 : index
      %c0_83 = arith.constant 0 : index
      %145 = vector.load %arg6[%144, %c0_82, %c0_83] : memref<4x32x8xbf16, #tpu.memory_space<vmem>>, vector<1x32x8xbf16>
      %146 = vector.shape_cast %145 : vector<1x32x8xbf16> to vector<32x8xbf16>
      %cst_84 = arith.constant dense<0.000000e+00> : vector<16x8xf32>
      %147 = tpu.matmul %18, %146, %cst_84 {dimension_numbers = #tpu.dot_dimension_numbers<[1], [0], [0], [1], [0, 0, 1, 1], [], []>} : vector<16x32xbf16>, vector<32x8xbf16>, vector<16x8xf32> -> vector<16x8xf32>
      %148 = arith.index_cast %arg28 : i32 to index
      %c0_85 = arith.constant 0 : index
      %c0_86 = arith.constant 0 : index
      %149 = vector.load %arg7[%148, %c0_85, %c0_86] : memref<4x1x8xf32, #tpu.memory_space<vmem>>, vector<1x1x8xf32>
      %150 = vector.shape_cast %149 : vector<1x1x8xf32> to vector<1x8xf32>
      %151 = vector.broadcast %150 : vector<1x8xf32> to vector<16x8xf32>
      %152 = arith.addf %147, %151 : vector<16x8xf32>
      %153 = arith.index_cast %arg28 : i32 to index
      %c0_87 = arith.constant 0 : index
      %c0_88 = arith.constant 0 : index
      %154 = vector.load %arg8[%153, %c0_87, %c0_88] : memref<4x32x8xbf16, #tpu.memory_space<vmem>>, vector<1x32x8xbf16>
      %155 = vector.shape_cast %154 : vector<1x32x8xbf16> to vector<32x8xbf16>
      %cst_89 = arith.constant dense<0.000000e+00> : vector<16x8xf32>
      %156 = tpu.matmul %18, %155, %cst_89 {dimension_numbers = #tpu.dot_dimension_numbers<[1], [0], [0], [1], [0, 0, 1, 1], [], []>} : vector<16x32xbf16>, vector<32x8xbf16>, vector<16x8xf32> -> vector<16x8xf32>
      %157 = arith.index_cast %arg28 : i32 to index
      %c0_90 = arith.constant 0 : index
      %c0_91 = arith.constant 0 : index
      %158 = vector.load %arg9[%157, %c0_90, %c0_91] : memref<4x1x8xf32, #tpu.memory_space<vmem>>, vector<1x1x8xf32>
      %159 = vector.shape_cast %158 : vector<1x1x8xf32> to vector<1x8xf32>
      %160 = vector.broadcast %159 : vector<1x8xf32> to vector<16x8xf32>
      %161 = arith.addf %156, %160 : vector<16x8xf32>
      %162 = arith.truncf %143 : vector<8x8xf32> to vector<8x8xbf16>
      %163 = arith.truncf %152 : vector<16x8xf32> to vector<16x8xbf16>
      %cst_92 = arith.constant dense<0.000000e+00> : vector<8x16xf32>
      %164 = tpu.matmul %162, %163, %cst_92 {dimension_numbers = #tpu.dot_dimension_numbers<[1], [1], [0], [0], [0, 0, 1, 0], [], []>} : vector<8x8xbf16>, vector<16x8xbf16>, vector<8x16xf32> -> vector<8x16xf32>
      %165 = arith.addf %164, %16 : vector<8x16xf32>
      %cst_93 = arith.constant dense<0xFF800000> : vector<8xf32>
      %166 = vector.multi_reduction <maximumf>, %165, %cst_93 [1] : vector<8x16xf32> to vector<8xf32>
      %167 = vector.shape_cast %166 : vector<8xf32> to vector<8x1xf32>
      %168 = vector.broadcast %167 : vector<8x1xf32> to vector<8x16xf32>
      %169 = arith.subf %165, %168 : vector<8x16xf32>
      %170 = math.exp %169 : vector<8x16xf32>
      %cst_94 = arith.constant dense<0.000000e+00> : vector<8xf32>
      %171 = vector.multi_reduction <add>, %170, %cst_94 [1] : vector<8x16xf32> to vector<8xf32>
      %172 = vector.shape_cast %171 : vector<8xf32> to vector<8x1xf32>
      %173 = tpu.reciprocal %172 {approx = true} : vector<8x1xf32> -> vector<8x1xf32>
      %174 = vector.broadcast %173 : vector<8x1xf32> to vector<8x16xf32>
      %175 = arith.mulf %170, %174 : vector<8x16xf32>
      %176 = arith.truncf %175 : vector<8x16xf32> to vector<8x16xbf16>
      %177 = arith.truncf %161 : vector<16x8xf32> to vector<16x8xbf16>
      %cst_95 = arith.constant dense<0.000000e+00> : vector<8x8xf32>
      %178 = tpu.matmul %176, %177, %cst_95 {dimension_numbers = #tpu.dot_dimension_numbers<[1], [0], [0], [1], [0, 0, 1, 1], [], []>} : vector<8x16xbf16>, vector<16x8xbf16>, vector<8x8xf32> -> vector<8x8xf32>
      %179 = arith.index_cast %arg28 : i32 to index
      %c0_96 = arith.constant 0 : index
      %c0_97 = arith.constant 0 : index
      %180 = vector.load %arg27[%179, %c0_96, %c0_97] : memref<4x8x8xf32, #tpu.memory_space<vmem>>, vector<1x8x8xf32>
      %181 = vector.shape_cast %180 : vector<1x8x8xf32> to vector<8x8xf32>
      %182 = vector.shape_cast %178 : vector<8x8xf32> to vector<1x8x8xf32>
      tpu.vector_store %arg27[%179, %c0_96, %c0_97], %182 {strides = array<i32>} : memref<4x8x8xf32, #tpu.memory_space<vmem>>, vector<1x8x8xf32>,
    }
    %c4_i32_9 = arith.constant 4 : i32
    %c0_10 = arith.constant 0 : index
    %c0_11 = arith.constant 0 : index
    %c0_12 = arith.constant 0 : index
    %20 = vector.load %arg27[%c0_10, %c0_11, %c0_12] : memref<4x8x8xf32, #tpu.memory_space<vmem>>, vector<1x8x8xf32>
    %21 = vector.shape_cast %20 : vector<1x8x8xf32> to vector<8x8xf32>
    %c1 = arith.constant 1 : index
    %c0_13 = arith.constant 0 : index
    %c0_14 = arith.constant 0 : index
    %22 = vector.load %arg27[%c1, %c0_13, %c0_14] : memref<4x8x8xf32, #tpu.memory_space<vmem>>, vector<1x8x8xf32>
    %23 = vector.shape_cast %22 : vector<1x8x8xf32> to vector<8x8xf32>
    %c2 = arith.constant 2 : index
    %c0_15 = arith.constant 0 : index
    %c0_16 = arith.constant 0 : index
    %24 = vector.load %arg27[%c2, %c0_15, %c0_16] : memref<4x8x8xf32, #tpu.memory_space<vmem>>, vector<1x8x8xf32>
    %25 = vector.shape_cast %24 : vector<1x8x8xf32> to vector<8x8xf32>
    %c3 = arith.constant 3 : index
    %c0_17 = arith.constant 0 : index
    %c0_18 = arith.constant 0 : index
    %26 = vector.load %arg27[%c3, %c0_17, %c0_18] : memref<4x8x8xf32, #tpu.memory_space<vmem>>, vector<1x8x8xf32>
    %27 = vector.shape_cast %26 : vector<1x8x8xf32> to vector<8x8xf32>
    %28 = tpu.concatenate %21, %23, %25, %27 in 1 : vector<8x8xf32>, vector<8x8xf32>, vector<8x8xf32>, vector<8x8xf32> -> vector<8x32xf32>
    %29 = arith.truncf %28 : vector<8x32xf32> to vector<8x32xbf16>
    %c0_19 = arith.constant 0 : index
    %c0_20 = arith.constant 0 : index
    %30 = vector.load %arg10[%c0_19, %c0_20] : memref<32x32xbf16, #tpu.memory_space<vmem>>, vector<32x32xbf16>
    %cst_21 = arith.constant dense<0.000000e+00> : vector<8x32xf32>
    %31 = tpu.matmul %29, %30, %cst_21 {dimension_numbers = #tpu.dot_dimension_numbers<[1], [0], [0], [1], [0, 0, 1, 1], [], []>} : vector<8x32xbf16>, vector<32x32xbf16>, vector<8x32xf32> -> vector<8x32xf32>
    %c0_22 = arith.constant 0 : index
    %c0_23 = arith.constant 0 : index
    %32 = vector.load %arg11[%c0_22, %c0_23] : memref<1x32xf32, #tpu.memory_space<vmem>>, vector<1x32xf32>
    %33 = vector.broadcast %32 : vector<1x32xf32> to vector<8x32xf32>
    %34 = arith.addf %31, %33 : vector<8x32xf32>
    %35 = arith.addf %6, %34 : vector<8x32xf32>
    %cst_24 = arith.constant dense<0.000000e+00> : vector<8xf32>
    %36 = vector.multi_reduction <add>, %35, %cst_24 [1] : vector<8x32xf32> to vector<8xf32>
    %37 = vector.shape_cast %36 : vector<8xf32> to vector<8x1xf32>
    %cst_25 = arith.constant 3.200000e+01 : f32
    %38 = vector.broadcast %cst_25 : f32 to vector<8x1xf32>
    %39 = arith.divf %37, %38 : vector<8x1xf32>
    %40 = vector.broadcast %39 : vector<8x1xf32> to vector<8x32xf32>
    %41 = arith.subf %35, %40 : vector<8x32xf32>
    %42 = arith.mulf %41, %41 : vector<8x32xf32>
    %cst_26 = arith.constant dense<0.000000e+00> : vector<8xf32>
    %43 = vector.multi_reduction <add>, %42, %cst_26 [1] : vector<8x32xf32> to vector<8xf32>
    %44 = vector.shape_cast %43 : vector<8xf32> to vector<8x1xf32>
    %cst_27 = arith.constant 3.200000e+01 : f32
    %45 = vector.broadcast %cst_27 : f32 to vector<8x1xf32>
    %46 = arith.divf %44, %45 : vector<8x1xf32>
    %cst_28 = arith.constant 9.99999974E-6 : f32
    %47 = vector.broadcast %cst_28 : f32 to vector<8x1xf32>
    %48 = arith.addf %46, %47 : vector<8x1xf32>
    %49 = math.rsqrt %48 : vector<8x1xf32>
    %50 = vector.broadcast %49 : vector<8x1xf32> to vector<8x32xf32>
    %51 = arith.mulf %41, %50 : vector<8x32xf32>
    %52 = vector.broadcast %7 : vector<1x32xf32> to vector<8x32xf32>
    %53 = arith.mulf %51, %52 : vector<8x32xf32>
    %54 = vector.broadcast %8 : vector<1x32xf32> to vector<8x32xf32>
    %55 = arith.addf %53, %54 : vector<8x32xf32>
    %c0_29 = arith.constant 0 : index
    %c0_30 = arith.constant 0 : index
    %c0_31 = arith.constant 0 : index
    %56 = vector.load %arg3[%c0_29, %c0_30, %c0_31] : memref<1x8x32xf32, #tpu.memory_space<vmem>>, vector<1x8x32xf32>
    %57 = vector.shape_cast %56 : vector<1x8x32xf32> to vector<8x32xf32>
    %58 = arith.truncf %55 : vector<8x32xf32> to vector<8x32xbf16>
    %59 = arith.truncf %57 : vector<8x32xf32> to vector<8x32xbf16>
    %c0_i32_32 = arith.constant 0 : i32
    %c4_i32_33 = arith.constant 4 : i32
    %60 = arith.addi %c0_i32_32, %c4_i32_33 : i32
    %c1_i32_34 = arith.constant 1 : i32
    scf.for %arg28 = %c0_i32_32 to %60 step %c1_i32_34  : i32 {
      %135 = arith.index_cast %arg28 : i32 to index
      %c0_77 = arith.constant 0 : index
      %c0_78 = arith.constant 0 : index
      %136 = vector.load %arg12[%135, %c0_77, %c0_78] : memref<4x32x8xbf16, #tpu.memory_space<vmem>>, vector<1x32x8xbf16>
      %137 = vector.shape_cast %136 : vector<1x32x8xbf16> to vector<32x8xbf16>
      %cst_79 = arith.constant dense<0.000000e+00> : vector<8x8xf32>
      %138 = tpu.matmul %58, %137, %cst_79 {dimension_numbers = #tpu.dot_dimension_numbers<[1], [0], [0], [1], [0, 0, 1, 1], [], []>} : vector<8x32xbf16>, vector<32x8xbf16>, vector<8x8xf32> -> vector<8x8xf32>
      %139 = arith.index_cast %arg28 : i32 to index
      %c0_80 = arith.constant 0 : index
      %c0_81 = arith.constant 0 : index
      %140 = vector.load %arg13[%139, %c0_80, %c0_81] : memref<4x1x8xf32, #tpu.memory_space<vmem>>, vector<1x1x8xf32>
      %141 = vector.shape_cast %140 : vector<1x1x8xf32> to vector<1x8xf32>
      %142 = vector.broadcast %141 : vector<1x8xf32> to vector<8x8xf32>
      %143 = arith.addf %138, %142 : vector<8x8xf32>
      %144 = arith.index_cast %arg28 : i32 to index
      %c0_82 = arith.constant 0 : index
      %c0_83 = arith.constant 0 : index
      %145 = vector.load %arg14[%144, %c0_82, %c0_83] : memref<4x32x8xbf16, #tpu.memory_space<vmem>>, vector<1x32x8xbf16>
      %146 = vector.shape_cast %145 : vector<1x32x8xbf16> to vector<32x8xbf16>
      %cst_84 = arith.constant dense<0.000000e+00> : vector<8x8xf32>
      %147 = tpu.matmul %59, %146, %cst_84 {dimension_numbers = #tpu.dot_dimension_numbers<[1], [0], [0], [1], [0, 0, 1, 1], [], []>} : vector<8x32xbf16>, vector<32x8xbf16>, vector<8x8xf32> -> vector<8x8xf32>
      %148 = arith.index_cast %arg28 : i32 to index
      %c0_85 = arith.constant 0 : index
      %c0_86 = arith.constant 0 : index
      %149 = vector.load %arg15[%148, %c0_85, %c0_86] : memref<4x1x8xf32, #tpu.memory_space<vmem>>, vector<1x1x8xf32>
      %150 = vector.shape_cast %149 : vector<1x1x8xf32> to vector<1x8xf32>
      %151 = vector.broadcast %150 : vector<1x8xf32> to vector<8x8xf32>
      %152 = arith.addf %147, %151 : vector<8x8xf32>
      %153 = arith.index_cast %arg28 : i32 to index
      %c0_87 = arith.constant 0 : index
      %c0_88 = arith.constant 0 : index
      %154 = vector.load %arg16[%153, %c0_87, %c0_88] : memref<4x32x8xbf16, #tpu.memory_space<vmem>>, vector<1x32x8xbf16>
      %155 = vector.shape_cast %154 : vector<1x32x8xbf16> to vector<32x8xbf16>
      %cst_89 = arith.constant dense<0.000000e+00> : vector<8x8xf32>
      %156 = tpu.matmul %59, %155, %cst_89 {dimension_numbers = #tpu.dot_dimension_numbers<[1], [0], [0], [1], [0, 0, 1, 1], [], []>} : vector<8x32xbf16>, vector<32x8xbf16>, vector<8x8xf32> -> vector<8x8xf32>
      %157 = arith.index_cast %arg28 : i32 to index
      %c0_90 = arith.constant 0 : index
      %c0_91 = arith.constant 0 : index
      %158 = vector.load %arg17[%157, %c0_90, %c0_91] : memref<4x1x8xf32, #tpu.memory_space<vmem>>, vector<1x1x8xf32>
      %159 = vector.shape_cast %158 : vector<1x1x8xf32> to vector<1x8xf32>
      %160 = vector.broadcast %159 : vector<1x8xf32> to vector<8x8xf32>
      %161 = arith.addf %156, %160 : vector<8x8xf32>
      %162 = arith.truncf %143 : vector<8x8xf32> to vector<8x8xbf16>
      %163 = arith.truncf %152 : vector<8x8xf32> to vector<8x8xbf16>
      %cst_92 = arith.constant dense<0.000000e+00> : vector<8x8xf32>
      %164 = tpu.matmul %162, %163, %cst_92 {dimension_numbers = #tpu.dot_dimension_numbers<[1], [1], [0], [0], [0, 0, 1, 0], [], []>} : vector<8x8xbf16>, vector<8x8xbf16>, vector<8x8xf32> -> vector<8x8xf32>
      %cst_93 = arith.constant dense<0xFF800000> : vector<8xf32>
      %165 = vector.multi_reduction <maximumf>, %164, %cst_93 [1] : vector<8x8xf32> to vector<8xf32>
      %166 = vector.shape_cast %165 : vector<8xf32> to vector<8x1xf32>
      %167 = vector.broadcast %166 : vector<8x1xf32> to vector<8x8xf32>
      %168 = arith.subf %164, %167 : vector<8x8xf32>
      %169 = math.exp %168 : vector<8x8xf32>
      %cst_94 = arith.constant dense<0.000000e+00> : vector<8xf32>
      %170 = vector.multi_reduction <add>, %169, %cst_94 [1] : vector<8x8xf32> to vector<8xf32>
      %171 = vector.shape_cast %170 : vector<8xf32> to vector<8x1xf32>
      %172 = tpu.reciprocal %171 {approx = true} : vector<8x1xf32> -> vector<8x1xf32>
      %173 = vector.broadcast %172 : vector<8x1xf32> to vector<8x8xf32>
      %174 = arith.mulf %169, %173 : vector<8x8xf32>
      %175 = arith.truncf %174 : vector<8x8xf32> to vector<8x8xbf16>
      %176 = arith.truncf %161 : vector<8x8xf32> to vector<8x8xbf16>
      %cst_95 = arith.constant dense<0.000000e+00> : vector<8x8xf32>
      %177 = tpu.matmul %175, %176, %cst_95 {dimension_numbers = #tpu.dot_dimension_numbers<[1], [0], [0], [1], [0, 0, 1, 1], [], []>} : vector<8x8xbf16>, vector<8x8xbf16>, vector<8x8xf32> -> vector<8x8xf32>
      %178 = arith.index_cast %arg28 : i32 to index
      %c0_96 = arith.constant 0 : index
      %c0_97 = arith.constant 0 : index
      %179 = vector.load %arg27[%178, %c0_96, %c0_97] : memref<4x8x8xf32, #tpu.memory_space<vmem>>, vector<1x8x8xf32>
      %180 = vector.shape_cast %179 : vector<1x8x8xf32> to vector<8x8xf32>
      %181 = vector.shape_cast %177 : vector<8x8xf32> to vector<1x8x8xf32>
      tpu.vector_store %arg27[%178, %c0_96, %c0_97], %181 {strides = array<i32>} : memref<4x8x8xf32, #tpu.memory_space<vmem>>, vector<1x8x8xf32>,
    }
    %c4_i32_35 = arith.constant 4 : i32
    %c0_36 = arith.constant 0 : index
    %c0_37 = arith.constant 0 : index
    %c0_38 = arith.constant 0 : index
    %61 = vector.load %arg27[%c0_36, %c0_37, %c0_38] : memref<4x8x8xf32, #tpu.memory_space<vmem>>, vector<1x8x8xf32>
    %62 = vector.shape_cast %61 : vector<1x8x8xf32> to vector<8x8xf32>
    %c1_39 = arith.constant 1 : index
    %c0_40 = arith.constant 0 : index
    %c0_41 = arith.constant 0 : index
    %63 = vector.load %arg27[%c1_39, %c0_40, %c0_41] : memref<4x8x8xf32, #tpu.memory_space<vmem>>, vector<1x8x8xf32>
    %64 = vector.shape_cast %63 : vector<1x8x8xf32> to vector<8x8xf32>
    %c2_42 = arith.constant 2 : index
    %c0_43 = arith.constant 0 : index
    %c0_44 = arith.constant 0 : index
    %65 = vector.load %arg27[%c2_42, %c0_43, %c0_44] : memref<4x8x8xf32, #tpu.memory_space<vmem>>, vector<1x8x8xf32>
    %66 = vector.shape_cast %65 : vector<1x8x8xf32> to vector<8x8xf32>
    %c3_45 = arith.constant 3 : index
    %c0_46 = arith.constant 0 : index
    %c0_47 = arith.constant 0 : index
    %67 = vector.load %arg27[%c3_45, %c0_46, %c0_47] : memref<4x8x8xf32, #tpu.memory_space<vmem>>, vector<1x8x8xf32>
    %68 = vector.shape_cast %67 : vector<1x8x8xf32> to vector<8x8xf32>
    %69 = tpu.concatenate %62, %64, %66, %68 in 1 : vector<8x8xf32>, vector<8x8xf32>, vector<8x8xf32>, vector<8x8xf32> -> vector<8x32xf32>
    %70 = arith.truncf %69 : vector<8x32xf32> to vector<8x32xbf16>
    %c0_48 = arith.constant 0 : index
    %c0_49 = arith.constant 0 : index
    %71 = vector.load %arg18[%c0_48, %c0_49] : memref<32x32xbf16, #tpu.memory_space<vmem>>, vector<32x32xbf16>
    %cst_50 = arith.constant dense<0.000000e+00> : vector<8x32xf32>
    %72 = tpu.matmul %70, %71, %cst_50 {dimension_numbers = #tpu.dot_dimension_numbers<[1], [0], [0], [1], [0, 0, 1, 1], [], []>} : vector<8x32xbf16>, vector<32x32xbf16>, vector<8x32xf32> -> vector<8x32xf32>
    %c0_51 = arith.constant 0 : index
    %c0_52 = arith.constant 0 : index
    %73 = vector.load %arg19[%c0_51, %c0_52] : memref<1x32xf32, #tpu.memory_space<vmem>>, vector<1x32xf32>
    %74 = vector.broadcast %73 : vector<1x32xf32> to vector<8x32xf32>
    %75 = arith.addf %72, %74 : vector<8x32xf32>
    %76 = arith.addf %55, %75 : vector<8x32xf32>
    %cst_53 = arith.constant dense<0.000000e+00> : vector<8xf32>
    %77 = vector.multi_reduction <add>, %76, %cst_53 [1] : vector<8x32xf32> to vector<8xf32>
    %78 = vector.shape_cast %77 : vector<8xf32> to vector<8x1xf32>
    %cst_54 = arith.constant 3.200000e+01 : f32
    %79 = vector.broadcast %cst_54 : f32 to vector<8x1xf32>
    %80 = arith.divf %78, %79 : vector<8x1xf32>
    %81 = vector.broadcast %80 : vector<8x1xf32> to vector<8x32xf32>
    %82 = arith.subf %76, %81 : vector<8x32xf32>
    %83 = arith.mulf %82, %82 : vector<8x32xf32>
    %cst_55 = arith.constant dense<0.000000e+00> : vector<8xf32>
    %84 = vector.multi_reduction <add>, %83, %cst_55 [1] : vector<8x32xf32> to vector<8xf32>
    %85 = vector.shape_cast %84 : vector<8xf32> to vector<8x1xf32>
    %cst_56 = arith.constant 3.200000e+01 : f32
    %86 = vector.broadcast %cst_56 : f32 to vector<8x1xf32>
    %87 = arith.divf %85, %86 : vector<8x1xf32>
    %cst_57 = arith.constant 9.99999974E-6 : f32
    %88 = vector.broadcast %cst_57 : f32 to vector<8x1xf32>
    %89 = arith.addf %87, %88 : vector<8x1xf32>
    %90 = math.rsqrt %89 : vector<8x1xf32>
    %91 = vector.broadcast %90 : vector<8x1xf32> to vector<8x32xf32>
    %92 = arith.mulf %82, %91 : vector<8x32xf32>
    %93 = vector.broadcast %7 : vector<1x32xf32> to vector<8x32xf32>
    %94 = arith.mulf %92, %93 : vector<8x32xf32>
    %95 = vector.broadcast %8 : vector<1x32xf32> to vector<8x32xf32>
    %96 = arith.addf %94, %95 : vector<8x32xf32>
    %97 = arith.truncf %96 : vector<8x32xf32> to vector<8x32xbf16>
    %c0_58 = arith.constant 0 : index
    %c0_59 = arith.constant 0 : index
    %98 = vector.load %arg20[%c0_58, %c0_59] : memref<32x64xbf16, #tpu.memory_space<vmem>>, vector<32x64xbf16>
    %cst_60 = arith.constant dense<0.000000e+00> : vector<8x64xf32>
    %99 = tpu.matmul %97, %98, %cst_60 {dimension_numbers = #tpu.dot_dimension_numbers<[1], [0], [0], [1], [0, 0, 1, 1], [], []>} : vector<8x32xbf16>, vector<32x64xbf16>, vector<8x64xf32> -> vector<8x64xf32>
    %c0_61 = arith.constant 0 : index
    %c0_62 = arith.constant 0 : index
    %100 = vector.load %arg21[%c0_61, %c0_62] : memref<1x64xf32, #tpu.memory_space<vmem>>, vector<1x64xf32>
    %101 = vector.broadcast %100 : vector<1x64xf32> to vector<8x64xf32>
    %102 = arith.addf %99, %101 : vector<8x64xf32>
    %cst_63 = arith.constant 0.000000e+00 : f32
    %103 = vector.broadcast %cst_63 : f32 to vector<8x64xf32>
    %104 = arith.maximumf %102, %103 : vector<8x64xf32>
    %105 = arith.truncf %104 : vector<8x64xf32> to vector<8x64xbf16>
    %c0_64 = arith.constant 0 : index
    %c0_65 = arith.constant 0 : index
    %106 = vector.load %arg22[%c0_64, %c0_65] : memref<64x32xbf16, #tpu.memory_space<vmem>>, vector<64x32xbf16>
    %cst_66 = arith.constant dense<0.000000e+00> : vector<8x32xf32>
    %107 = tpu.matmul %105, %106, %cst_66 {dimension_numbers = #tpu.dot_dimension_numbers<[1], [0], [0], [1], [0, 0, 1, 1], [], []>} : vector<8x64xbf16>, vector<64x32xbf16>, vector<8x32xf32> -> vector<8x32xf32>
    %c0_67 = arith.constant 0 : index
    %c0_68 = arith.constant 0 : index
    %108 = vector.load %arg23[%c0_67, %c0_68] : memref<1x32xf32, #tpu.memory_space<vmem>>, vector<1x32xf32>
    %109 = vector.broadcast %108 : vector<1x32xf32> to vector<8x32xf32>
    %110 = arith.addf %107, %109 : vector<8x32xf32>
    %111 = arith.addf %96, %110 : vector<8x32xf32>
    %cst_69 = arith.constant dense<0.000000e+00> : vector<8xf32>
    %112 = vector.multi_reduction <add>, %111, %cst_69 [1] : vector<8x32xf32> to vector<8xf32>
    %113 = vector.shape_cast %112 : vector<8xf32> to vector<8x1xf32>
    %cst_70 = arith.constant 3.200000e+01 : f32
    %114 = vector.broadcast %cst_70 : f32 to vector<8x1xf32>
    %115 = arith.divf %113, %114 : vector<8x1xf32>
    %116 = vector.broadcast %115 : vector<8x1xf32> to vector<8x32xf32>
    %117 = arith.subf %111, %116 : vector<8x32xf32>
    %118 = arith.mulf %117, %117 : vector<8x32xf32>
    %cst_71 = arith.constant dense<0.000000e+00> : vector<8xf32>
    %119 = vector.multi_reduction <add>, %118, %cst_71 [1] : vector<8x32xf32> to vector<8xf32>
    %120 = vector.shape_cast %119 : vector<8xf32> to vector<8x1xf32>
    %cst_72 = arith.constant 3.200000e+01 : f32
    %121 = vector.broadcast %cst_72 : f32 to vector<8x1xf32>
    %122 = arith.divf %120, %121 : vector<8x1xf32>
    %cst_73 = arith.constant 9.99999974E-6 : f32
    %123 = vector.broadcast %cst_73 : f32 to vector<8x1xf32>
    %124 = arith.addf %122, %123 : vector<8x1xf32>
    %125 = math.rsqrt %124 : vector<8x1xf32>
    %126 = vector.broadcast %125 : vector<8x1xf32> to vector<8x32xf32>
    %127 = arith.mulf %117, %126 : vector<8x32xf32>
    %128 = vector.broadcast %7 : vector<1x32xf32> to vector<8x32xf32>
    %129 = arith.mulf %127, %128 : vector<8x32xf32>
    %130 = vector.broadcast %8 : vector<1x32xf32> to vector<8x32xf32>
    %131 = arith.addf %129, %130 : vector<8x32xf32>
    %c0_74 = arith.constant 0 : index
    %c0_75 = arith.constant 0 : index
    %c0_76 = arith.constant 0 : index
    %132 = vector.load %arg26[%c0_74, %c0_75, %c0_76] : memref<1x8x32xf32, #tpu.memory_space<vmem>>, vector<1x8x32xf32>
    %133 = vector.shape_cast %132 : vector<1x8x32xf32> to vector<8x32xf32>
    %134 = vector.shape_cast %131 : vector<8x32xf32> to vector<1x8x32xf32>
    tpu.vector_store %arg26[%c0_74, %c0_75, %c0_76], %134 {strides = array<i32>} : memref<1x8x32xf32, #tpu.memory_space<vmem>>, vector<1x8x32xf32>,
    return
  }
  func.func @transform_0(%arg0: i32, %arg1: i32) -> (i32, i32, i32) {
    %c0_i32 = arith.constant 0 : i32
    %c0_i32_0 = arith.constant 0 : i32
    %c0_i32_1 = arith.constant 0 : i32
    return %arg0, %c0_i32, %c0_i32_0 : i32, i32, i32
  }
  func.func @transform_1(%arg0: i32, %arg1: i32) -> (i32, i32, i32) {
    %c0_i32 = arith.constant 0 : i32
    %c0_i32_0 = arith.constant 0 : i32
    %c0_i32_1 = arith.constant 0 : i32
    return %arg0, %c0_i32, %c0_i32_0 : i32, i32, i32
  }
  func.func @transform_2(%arg0: i32, %arg1: i32) -> (i32, i32, i32) {
    %c0_i32 = arith.constant 0 : i32
    %c0_i32_0 = arith.constant 0 : i32
    %c0_i32_1 = arith.constant 0 : i32
    %c0_i32_2 = arith.constant 0 : i32
    return %c0_i32, %c0_i32_0, %c0_i32_1 : i32, i32, i32
  }
  func.func @transform_3(%arg0: i32, %arg1: i32) -> (i32, i32, i32) {
    %c0_i32 = arith.constant 0 : i32
    %c0_i32_0 = arith.constant 0 : i32
    %c0_i32_1 = arith.constant 0 : i32
    %c0_i32_2 = arith.constant 0 : i32
    return %c0_i32, %c0_i32_0, %c0_i32_1 : i32, i32, i32
  }
  func.func @transform_4(%arg0: i32, %arg1: i32) -> (i32, i32, i32) {
    %c0_i32 = arith.constant 0 : i32
    %c0_i32_0 = arith.constant 0 : i32
    %c0_i32_1 = arith.constant 0 : i32
    %c0_i32_2 = arith.constant 0 : i32
    return %c0_i32, %c0_i32_0, %c0_i32_1 : i32, i32, i32
  }
  func.func @transform_5(%arg0: i32, %arg1: i32) -> (i32, i32, i32) {
    %c0_i32 = arith.constant 0 : i32
    %c0_i32_0 = arith.constant 0 : i32
    %c0_i32_1 = arith.constant 0 : i32
    %c0_i32_2 = arith.constant 0 : i32
    return %c0_i32, %c0_i32_0, %c0_i32_1 : i32, i32, i32
  }
  func.func @transform_6(%arg0: i32, %arg1: i32) -> (i32, i32, i32) {
    %c0_i32 = arith.constant 0 : i32
    %c0_i32_0 = arith.constant 0 : i32
    %c0_i32_1 = arith.constant 0 : i32
    %c0_i32_2 = arith.constant 0 : i32
    return %c0_i32, %c0_i32_0, %c0_i32_1 : i32, i32, i32
  }
  func.func @transform_7(%arg0: i32, %arg1: i32) -> (i32, i32, i32) {
    %c0_i32 = arith.constant 0 : i32
    %c0_i32_0 = arith.constant 0 : i32
    %c0_i32_1 = arith.constant 0 : i32
    %c0_i32_2 = arith.constant 0 : i32
    return %c0_i32, %c0_i32_0, %c0_i32_1 : i32, i32, i32
  }
  func.func @transform_8(%arg0: i32, %arg1: i32) -> (i32, i32) {
    %c0_i32 = arith.constant 0 : i32
    %c0_i32_0 = arith.constant 0 : i32
    %c0_i32_1 = arith.constant 0 : i32
    return %c0_i32, %c0_i32_0 : i32, i32
  }
  func.func @transform_9(%arg0: i32, %arg1: i32) -> (i32, i32) {
    %c0_i32 = arith.constant 0 : i32
    %c0_i32_0 = arith.constant 0 : i32
    %c0_i32_1 = arith.constant 0 : i32
    return %c0_i32, %c0_i32_0 : i32, i32
  }
  func.func @transform_10(%arg0: i32, %arg1: i32) -> (i32, i32, i32) {
    %c0_i32 = arith.constant 0 : i32
    %c0_i32_0 = arith.constant 0 : i32
    %c0_i32_1 = arith.constant 0 : i32
    %c0_i32_2 = arith.constant 0 : i32
    return %c0_i32, %c0_i32_0, %c0_i32_1 : i32, i32, i32
  }
  func.func @transform_11(%arg0: i32, %arg1: i32) -> (i32, i32, i32) {
    %c0_i32 = arith.constant 0 : i32
    %c0_i32_0 = arith.constant 0 : i32
    %c0_i32_1 = arith.constant 0 : i32
    %c0_i32_2 = arith.constant 0 : i32
    return %c0_i32, %c0_i32_0, %c0_i32_1 : i32, i32, i32
  }
  func.func @transform_12(%arg0: i32, %arg1: i32) -> (i32, i32, i32) {
    %c0_i32 = arith.constant 0 : i32
    %c0_i32_0 = arith.constant 0 : i32
    %c0_i32_1 = arith.constant 0 : i32
    %c0_i32_2 = arith.constant 0 : i32
    return %c0_i32, %c0_i32_0, %c0_i32_1 : i32, i32, i32
  }
  func.func @transform_13(%arg0: i32, %arg1: i32) -> (i32, i32, i32) {
    %c0_i32 = arith.constant 0 : i32
    %c0_i32_0 = arith.constant 0 : i32
    %c0_i32_1 = arith.constant 0 : i32
    %c0_i32_2 = arith.constant 0 : i32
    return %c0_i32, %c0_i32_0, %c0_i32_1 : i32, i32, i32
  }
  func.func @transform_14(%arg0: i32, %arg1: i32) -> (i32, i32, i32) {
    %c0_i32 = arith.constant 0 : i32
    %c0_i32_0 = arith.constant 0 : i32
    %c0_i32_1 = arith.constant 0 : i32
    %c0_i32_2 = arith.constant 0 : i32
    return %c0_i32, %c0_i32_0, %c0_i32_1 : i32, i32, i32
  }
  func.func @transform_15(%arg0: i32, %arg1: i32) -> (i32, i32, i32) {
    %c0_i32 = arith.constant 0 : i32
    %c0_i32_0 = arith.constant 0 : i32
    %c0_i32_1 = arith.constant 0 : i32
    %c0_i32_2 = arith.constant 0 : i32
    return %c0_i32, %c0_i32_0, %c0_i32_1 : i32, i32, i32
  }
  func.func @transform_16(%arg0: i32, %arg1: i32) -> (i32, i32) {
    %c0_i32 = arith.constant 0 : i32
    %c0_i32_0 = arith.constant 0 : i32
    %c0_i32_1 = arith.constant 0 : i32
    return %c0_i32, %c0_i32_0 : i32, i32
  }
  func.func @transform_17(%arg0: i32, %arg1: i32) -> (i32, i32) {
    %c0_i32 = arith.constant 0 : i32
    %c0_i32_0 = arith.constant 0 : i32
    %c0_i32_1 = arith.constant 0 : i32
    return %c0_i32, %c0_i32_0 : i32, i32
  }
  func.func @transform_18(%arg0: i32, %arg1: i32) -> (i32, i32) {
    %c0_i32 = arith.constant 0 : i32
    %c0_i32_0 = arith.constant 0 : i32
    %c0_i32_1 = arith.constant 0 : i32
    return %c0_i32, %c0_i32_0 : i32, i32
  }
  func.func @transform_19(%arg0: i32, %arg1: i32) -> (i32, i32) {
    %c0_i32 = arith.constant 0 : i32
    %c0_i32_0 = arith.constant 0 : i32
    %c0_i32_1 = arith.constant 0 : i32
    return %c0_i32, %c0_i32_0 : i32, i32
  }
  func.func @transform_20(%arg0: i32, %arg1: i32) -> (i32, i32) {
    %c0_i32 = arith.constant 0 : i32
    %c0_i32_0 = arith.constant 0 : i32
    %c0_i32_1 = arith.constant 0 : i32
    return %c0_i32, %c0_i32_0 : i32, i32
  }
  func.func @transform_21(%arg0: i32, %arg1: i32) -> (i32, i32) {
    %c0_i32 = arith.constant 0 : i32
    %c0_i32_0 = arith.constant 0 : i32
    %c0_i32_1 = arith.constant 0 : i32
    return %c0_i32, %c0_i32_0 : i32, i32
  }
  func.func @transform_22(%arg0: i32, %arg1: i32) -> (i32, i32) {
    %c0_i32 = arith.constant 0 : i32
    %c0_i32_0 = arith.constant 0 : i32
    %c0_i32_1 = arith.constant 0 : i32
    return %c0_i32, %c0_i32_0 : i32, i32
  }
  func.func @transform_23(%arg0: i32, %arg1: i32) -> (i32, i32) {
    %c0_i32 = arith.constant 0 : i32
    %c0_i32_0 = arith.constant 0 : i32
    %c0_i32_1 = arith.constant 0 : i32
    return %c0_i32, %c0_i32_0 : i32, i32
  }
  func.func @transform_24(%arg0: i32, %arg1: i32) -> (i32, i32, i32) {
    %c0_i32 = arith.constant 0 : i32
    %c0_i32_0 = arith.constant 0 : i32
    return %arg0, %arg1, %c0_i32 : i32, i32, i32
  }
}

</mosaic_0001>

<llo_original>
// kernel: tpu_custom_call.1
$region0: #{tpu_custom_call.1}
  #allocation0 [shape = 'u32[]', space=smem, size = 0x4, offset = 0x4, fixed_abs, tag = 'smem constant byte address 0x4 - core index']
  #allocation1 [shape = 'u32[144,128]{1,0:T(1,128)}', space=vmem, size = 0x12000, scoped, tag = 'internal scratch']
  #allocation2 [shape = 'f32[4,8,8]{2,1,0:T(8,128)}', space=vmem, size = 0x4000, scoped, tag = 'scratch operand']
  %s0 = inlined_call_operand.hbm [shape: f32[2,16,32], index: 0, kind: input, shape index: {}]
  %s1 = inlined_call_operand.hbm [shape: f32[2,8,32], index: 1, kind: input, shape index: {}]
  %s2 = inlined_call_operand.hbm [shape: bf16[4,32,8], index: 2, kind: input, shape index: {}]
  %s3 = inlined_call_operand.hbm [shape: f32[4,1,8], index: 3, kind: input, shape index: {}]
  %s4 = inlined_call_operand.hbm [shape: bf16[4,32,8], index: 4, kind: input, shape index: {}]
  %s5 = inlined_call_operand.hbm [shape: f32[4,1,8], index: 5, kind: input, shape index: {}]
  %s6 = inlined_call_operand.hbm [shape: bf16[4,32,8], index: 6, kind: input, shape index: {}]
  %s7 = inlined_call_operand.hbm [shape: f32[4,1,8], index: 7, kind: input, shape index: {}]
  %s8 = inlined_call_operand.hbm [shape: bf16[32,32], index: 8, kind: input, shape index: {}]
  %s9 = inlined_call_operand.hbm [shape: f32[1,32], index: 9, kind: input, shape index: {}]
  %s10 = inlined_call_operand.hbm [shape: bf16[4,32,8], index: 10, kind: input, shape index: {}]
  %s11 = inlined_call_operand.hbm [shape: f32[4,1,8], index: 11, kind: input, shape index: {}]
  %s12 = inlined_call_operand.hbm [shape: bf16[4,32,8], index: 12, kind: input, shape index: {}]
  %s13 = inlined_call_operand.hbm [shape: f32[4,1,8], index: 13, kind: input, shape index: {}]
  %s14 = inlined_call_operand.hbm [shape: bf16[4,32,8], index: 14, kind: input, shape index: {}]
  %s15 = inlined_call_operand.hbm [shape: f32[4,1,8], index: 15, kind: input, shape index: {}]
  %s16 = inlined_call_operand.hbm [shape: bf16[32,32], index: 16, kind: input, shape index: {}]
  %s17 = inlined_call_operand.hbm [shape: f32[1,32], index: 17, kind: input, shape index: {}]
  %s18 = inlined_call_operand.hbm [shape: bf16[32,64], index: 18, kind: input, shape index: {}]
  %s19 = inlined_call_operand.hbm [shape: f32[1,64], index: 19, kind: input, shape index: {}]
  %s20 = inlined_call_operand.hbm [shape: bf16[64,32], index: 20, kind: input, shape index: {}]
  %s21 = inlined_call_operand.hbm [shape: f32[1,32], index: 21, kind: input, shape index: {}]
  %s22 = inlined_call_operand.hbm [shape: f32[1,32], index: 22, kind: input, shape index: {}]
  %s23 = inlined_call_operand.hbm [shape: f32[1,32], index: 23, kind: input, shape index: {}]
  %s24 = inlined_call_operand.hbm [shape: f32[2,16,32], index: 24, kind: output, shape index: {}]
  %s25 = sld [smem:[#allocation0]]
  $region239: #{tpu_custom_call.1} parent=0
    _
  %s27 = ssub.s32 1, %s25
  %s28 = scalar_select 0, %s27, %s25
  $region1: #{tpu_custom_call.1} parent=0
    #allocation3 [shape = 'u8[16384]{0}', space=vmem, size = 0x4000, scoped, tag = 'input window, operand 0']
    #allocation4 [shape = 's32[2]{0}', space=sflag, size = 0x8, scoped, tag = 'scoped memory for tpu_custom_call.1']
    #allocation5 [shape = 's32[2]{0}', space=sflag, size = 0x8, scoped, tag = 'scoped memory for tpu_custom_call.1']
    #allocation6 [shape = 'u8[8192]{0}', space=vmem, size = 0x2000, scoped, tag = 'input window, operand 1']
    #allocation7 [shape = 's32[2]{0}', space=sflag, size = 0x8, scoped, tag = 'scoped memory for tpu_custom_call.1']
    #allocation8 [shape = 'u8[32768]{0}', space=vmem, size = 0x8000, scoped, tag = 'input window, operand 2, single buffered']
    #allocation9 [shape = 'u8[2048]{0}', space=vmem, size = 0x800, scoped, tag = 'input window, operand 3, single buffered']
    #allocation10 [shape = 's32[1]{0}', space=sflag, size = 0x4, scoped, tag = 'scoped memory for tpu_custom_call.1']
    #allocation11 [shape = 'u8[32768]{0}', space=vmem, size = 0x8000, scoped, tag = 'input window, operand 4, single buffered']
    #allocation12 [shape = 'u8[2048]{0}', space=vmem, size = 0x800, scoped, tag = 'input window, operand 5, single buffered']
    #allocation13 [shape = 's32[1]{0}', space=sflag, size = 0x4, scoped, tag = 'scoped memory for tpu_custom_call.1']
    #allocation14 [shape = 'u8[32768]{0}', space=vmem, size = 0x8000, scoped, tag = 'input window, operand 6, single buffered']
    #allocation15 [shape = 'u8[2048]{0}', space=vmem, size = 0x800, scoped, tag = 'input window, operand 7, single buffered']
    #allocation16 [shape = 's32[1]{0}', space=sflag, size = 0x4, scoped, tag = 'scoped memory for tpu_custom_call.1']
    #allocation17 [shape = 'u8[8192]{0}', space=vmem, size = 0x2000, scoped, tag = 'input window, operand 8, single buffered']
    #allocation18 [shape = 'u8[512]{0}', space=vmem, size = 0x400, scoped, tag = 'input window, operand 9, single buffered']
    #allocation19 [shape = 's32[1]{0}', space=sflag, size = 0x4, scoped, tag = 'scoped memory for tpu_custom_call.1']
    #allocation20 [shape = 'u8[32768]{0}', space=vmem, size = 0x8000, scoped, tag = 'input window, operand 10, single buffered']
    #allocation21 [shape = 'u8[2048]{0}', space=vmem, size = 0x800, scoped, tag = 'input window, operand 11, single buffered']
    #allocation22 [shape = 's32[1]{0}', space=sflag, size = 0x4, scoped, tag = 'scoped memory for tpu_custom_call.1']
    #allocation23 [shape = 'u8[32768]{0}', space=vmem, size = 0x8000, scoped, tag = 'input window, operand 12, single buffered']
    #allocation24 [shape = 'u8[2048]{0}', space=vmem, size = 0x800, scoped, tag = 'input window, operand 13, single buffered']
    #allocation25 [shape = 's32[1]{0}', space=sflag, size = 0x4, scoped, tag = 'scoped memory for tpu_custom_call.1']
    #allocation26 [shape = 'u8[32768]{0}', space=vmem, size = 0x8000, scoped, tag = 'input window, operand 14, single buffered']
    #allocation27 [shape = 'u8[2048]{0}', space=vmem, size = 0x800, scoped, tag = 'input window, operand 15, single buffered']
    #allocation28 [shape = 's32[1]{0}', space=sflag, size = 0x4, scoped, tag = 'scoped memory for tpu_custom_call.1']
    #allocation29 [shape = 'u8[8192]{0}', space=vmem, size = 0x2000, scoped, tag = 'input window, operand 16, single buffered']
    #allocation30 [shape = 'u8[512]{0}', space=vmem, size = 0x400, scoped, tag = 'input window, operand 17, single buffered']
    #allocation31 [shape = 's32[1]{0}', space=sflag, size = 0x4, scoped, tag = 'scoped memory for tpu_custom_call.1']
    #allocation32 [shape = 'u8[8192]{0}', space=vmem, size = 0x2000, scoped, tag = 'input window, operand 18, single buffered']
    #allocation33 [shape = 'u8[512]{0}', space=vmem, size = 0x400, scoped, tag = 'input window, operand 19, single buffered']
    #allocation34 [shape = 's32[1]{0}', space=sflag, size = 0x4, scoped, tag = 'scoped memory for tpu_custom_call.1']
    #allocation35 [shape = 'u8[16384]{0}', space=vmem, size = 0x4000, scoped, tag = 'input window, operand 20, single buffered']
    #allocation36 [shape = 'u8[512]{0}', space=vmem, size = 0x400, scoped, tag = 'input window, operand 21, single buffered']
    #allocation37 [shape = 's32[1]{0}', space=sflag, size = 0x4, scoped, tag = 'scoped memory for tpu_custom_call.1']
    #allocation38 [shape = 'u8[512]{0}', space=vmem, size = 0x400, scoped, tag = 'input window, operand 22, single buffered']
    #allocation39 [shape = 'u8[512]{0}', space=vmem, size = 0x400, scoped, tag = 'input window, operand 23, single buffered']
    #allocation40 [shape = 's32[1]{0}', space=sflag, size = 0x4, scoped, tag = 'scoped memory for tpu_custom_call.1']
    #allocation41 [shape = 'u8[8192]{0}', space=vmem, size = 0x2000, scoped, tag = 'output window, operand 0']
    %29 = vsyncpa [#allocation4], 0
    %s30 = scalar_lea.sflag [#allocation4], 1
    %31 = vsyncpa %s30, 0
    %32 = vsyncpa [#allocation7], 0
    %s33 = scalar_lea.sflag [#allocation7], 1
    %34 = vsyncpa %s33, 0
    %35 = vsyncpa [#allocation10], 0
    %36 = vsyncpa [#allocation13], 0
    %37 = vsyncpa [#allocation16], 0
    %38 = vsyncpa [#allocation19], 0
    %39 = vsyncpa [#allocation22], 0
    %40 = vsyncpa [#allocation25], 0
    %41 = vsyncpa [#allocation28], 0
    %42 = vsyncpa [#allocation31], 0
    %43 = vsyncpa [#allocation34], 0
    %44 = vsyncpa [#allocation37], 0
    %45 = vsyncpa [#allocation40], 0
    %46 = vsyncpa [#allocation5], 0
    %s47 = scalar_lea.sflag [#allocation5], 1
    %48 = vsyncpa %s47, 0
    loop: start=0, step=1, limit=6
    $region2: #{tpu_custom_call.1} parent=1 // loop_pre_header
      _
    $region3: #{tpu_custom_call.1} parent=1 // loop_header
      %s50 = sphi 0, %s54
      %p51 = scmp.ge.s32.totalorder %s50, 6
      %s57 = sphi 0, %s69
      %s58 = sphi 0, %s65
      %s59 = sphi 0, %s57
      %s60 = sphi 0, %s58
      %s61 = sphi 0, %s59
      %s62 = sphi 0, %s60
      %s72 = sphi 0, %s74
      %s75 = sphi 0, %s72
      %s76 = sphi 0, %s75
      %s92 = sphi 0, %s76
      %s98 = sphi 0, %s100
      %s101 = sphi 0, %s98
      %s102 = sphi 0, %s101
      %s118 = sphi 0, %s102
      %s122 = sphi 0, %s122
      %s124 = sphi 0, %s122
      %s125 = sphi 0, %s124
      %s139 = sphi 0, %s125
      %s143 = sphi 0, %s143
      %s145 = sphi 0, %s143
      %s146 = sphi 0, %s145
      %s160 = sphi 0, %s146
      %s164 = sphi 0, %s164
      %s166 = sphi 0, %s164
      %s167 = sphi 0, %s166
      %s181 = sphi 0, %s167
      %s185 = sphi 0, %s185
      %s187 = sphi 0, %s185
      %s188 = sphi 0, %s187
      %s202 = sphi 0, %s188
      %s206 = sphi 0, %s206
      %s208 = sphi 0, %s206
      %s209 = sphi 0, %s208
      %s223 = sphi 0, %s209
      %s227 = sphi 0, %s227
      %s229 = sphi 0, %s227
      %s230 = sphi 0, %s229
      %s244 = sphi 0, %s230
      %s248 = sphi 0, %s248
      %s250 = sphi 0, %s248
      %s251 = sphi 0, %s250
      %s265 = sphi 0, %s251
      %s269 = sphi 0, %s269
      %s271 = sphi 0, %s269
      %s272 = sphi 0, %s271
      %s286 = sphi 0, %s272
      %s290 = sphi 0, %s290
      %s292 = sphi 0, %s290
      %s293 = sphi 0, %s292
      %s307 = sphi 0, %s293
      %s311 = sphi 0, %s311
      %s313 = sphi 0, %s311
      %s314 = sphi 0, %s313
      %s328 = sphi 0, %s314
      %s332 = sphi 0, %s332
      %s334 = sphi 0, %s332
      %s335 = sphi 0, %s334
      %s349 = sphi 0, %s335
      %s353 = sphi 0, %s353
      %s355 = sphi 0, %s353
      %s356 = sphi 0, %s355
      %s370 = sphi 0, %s356
      %s374 = sphi 0, %s374
      %s376 = sphi 0, %s374
      %s377 = sphi 0, %s376
      %s391 = sphi 0, %s377
      %s395 = sphi 0, %s395
      %s397 = sphi 0, %s395
      %s398 = sphi 0, %s397
      %s412 = sphi 0, %s398
      %s416 = sphi 0, %s416
      %s418 = sphi 0, %s416
      %s419 = sphi 0, %s418
      %s433 = sphi 0, %s419
      %s437 = sphi 0, %s437
      %s439 = sphi 0, %s437
      %s440 = sphi 0, %s439
      %s454 = sphi 0, %s440
      %s458 = sphi 0, %s458
      %s460 = sphi 0, %s458
      %s461 = sphi 0, %s460
      %s475 = sphi 0, %s461
      %s479 = sphi 0, %s479
      %s481 = sphi 0, %s479
      %s482 = sphi 0, %s481
      %s496 = sphi 0, %s482
      %s500 = sphi 0, %s500
      %s502 = sphi 0, %s500
      %s503 = sphi 0, %s502
      %s517 = sphi 0, %s503
      %s521 = sphi 0, %s521
      %s523 = sphi 0, %s521
      %s524 = sphi 0, %s523
      %s538 = sphi 0, %s524
      %s542 = sphi 0, %s542
      %s544 = sphi 0, %s542
      %s545 = sphi 0, %s544
      %s559 = sphi 0, %s545
      %s563 = sphi 0, %s563
      %s565 = sphi 0, %s563
      %s566 = sphi 0, %s565
      %s580 = sphi 0, %s566
      %s588 = sphi 0, %s590
      %s591 = sphi 0, %s588
      %s592 = sphi 0, %s591
      %s608 = sphi 0, %s592
    $region4: #{tpu_custom_call.1} parent=1 // loop_header_branch
      %53 = sbr.rel (%p51) target = $region8
    $region5: #{tpu_custom_call.1} parent=1 // loop_body
      %s55 = ssub.s32 %s50, 1
      %s56 = ssub.s32 %s50, 2
      %s63 = sadd.s32 1, %s58
      %p64 = scmp.ge.s32.totalorder %s63, 2
      %s65 = scalar_select %p64, 0, %s63
      %s66 = sadd.s32 1, %s57
      %s67 = scalar_select %p64, %s66, %s57
      %p68 = scmp.ge.s32.totalorder %s67, 2
      %s69 = scalar_select %p68, 0, %s67
      %s70 = ssub.s32 %s57, %s69
      %p71 = scmp.eq.s32.totalorder %s70, 0
      %s73 = sadd.s32 %s72, 1
      %s74 = scalar_select %p71, %s72, %s73
      %p77 = pneg %p71
      %p78 = scmp.eq.s32.totalorder %s50, 3
      %p79 = por %p77, %p78
      %p80 = scmp.ne.s32.totalorder %s72, %s75
      %p81 = scmp.eq.s32.totalorder %s50, 0
      %p82 = por %p80, %p81
      %p83 = scmp.ne.s32.totalorder %s72, %s75
      %p84 = scmp.eq.s32.totalorder %s55, 3
      %p85 = por %p83, %p84
      %p86 = scmp.ne.s32.totalorder %s75, %s76
      %p87 = scmp.eq.s32.totalorder %s55, 0
      %p88 = por %p86, %p87
      %p89 = scmp.ne.s32.totalorder %s75, %s76
      %p90 = scmp.eq.s32.totalorder %s56, 3
      %p91 = por %p89, %p90
      %p93 = scmp.ne.s32.totalorder %s76, %s92
      %p94 = scmp.eq.s32.totalorder %s56, 0
      %p95 = por %p93, %p94
      %s96 = ssub.s32 %s57, %s69
      %p97 = scmp.eq.s32.totalorder %s96, 0
      %s99 = sadd.s32 %s98, 1
      %s100 = scalar_select %p97, %s98, %s99
      %p103 = pneg %p97
      %p104 = scmp.eq.s32.totalorder %s50, 3
      %p105 = por %p103, %p104
      %p106 = scmp.ne.s32.totalorder %s98, %s101
      %p107 = scmp.eq.s32.totalorder %s50, 0
      %p108 = por %p106, %p107
      %p109 = scmp.ne.s32.totalorder %s98, %s101
      %p110 = scmp.eq.s32.totalorder %s55, 3
      %p111 = por %p109, %p110
      %p112 = scmp.ne.s32.totalorder %s101, %s102
      %p113 = scmp.eq.s32.totalorder %s55, 0
      %p114 = por %p112, %p113
      %p115 = scmp.ne.s32.totalorder %s101, %s102
      %p116 = scmp.eq.s32.totalorder %s56, 3
      %p117 = por %p115, %p116
      %p119 = scmp.ne.s32.totalorder %s102, %s118
      %p120 = scmp.eq.s32.totalorder %s56, 0
      %p121 = por %p119, %p120
      %s123 = sadd.s32 %s122, 1
      %p126 = scmp.eq.s32.totalorder %s50, 3
      %p127 = scmp.ne.s32.totalorder %s122, %s124
      %p128 = scmp.eq.s32.totalorder %s50, 0
      %p129 = por %p127, %p128
      %p130 = scmp.ne.s32.totalorder %s122, %s124
      %p131 = scmp.eq.s32.totalorder %s55, 3
      %p132 = por %p130, %p131
      %p133 = scmp.ne.s32.totalorder %s124, %s125
      %p134 = scmp.eq.s32.totalorder %s55, 0
      %p135 = por %p133, %p134
      %p136 = scmp.ne.s32.totalorder %s124, %s125
      %p137 = scmp.eq.s32.totalorder %s56, 3
      %p138 = por %p136, %p137
      %p140 = scmp.ne.s32.totalorder %s125, %s139
      %p141 = scmp.eq.s32.totalorder %s56, 0
      %p142 = por %p140, %p141
      %s144 = sadd.s32 %s143, 1
      %p147 = scmp.eq.s32.totalorder %s50, 3
      %p148 = scmp.ne.s32.totalorder %s143, %s145
      %p149 = scmp.eq.s32.totalorder %s50, 0
      %p150 = por %p148, %p149
      %p151 = scmp.ne.s32.totalorder %s143, %s145
      %p152 = scmp.eq.s32.totalorder %s55, 3
      %p153 = por %p151, %p152
      %p154 = scmp.ne.s32.totalorder %s145, %s146
      %p155 = scmp.eq.s32.totalorder %s55, 0
      %p156 = por %p154, %p155
      %p157 = scmp.ne.s32.totalorder %s145, %s146
      %p158 = scmp.eq.s32.totalorder %s56, 3
      %p159 = por %p157, %p158
      %p161 = scmp.ne.s32.totalorder %s146, %s160
      %p162 = scmp.eq.s32.totalorder %s56, 0
      %p163 = por %p161, %p162
      %s165 = sadd.s32 %s164, 1
      %p168 = scmp.eq.s32.totalorder %s50, 3
      %p169 = scmp.ne.s32.totalorder %s164, %s166
      %p170 = scmp.eq.s32.totalorder %s50, 0
      %p171 = por %p169, %p170
      %p172 = scmp.ne.s32.totalorder %s164, %s166
      %p173 = scmp.eq.s32.totalorder %s55, 3
      %p174 = por %p172, %p173
      %p175 = scmp.ne.s32.totalorder %s166, %s167
      %p176 = scmp.eq.s32.totalorder %s55, 0
      %p177 = por %p175, %p176
      %p178 = scmp.ne.s32.totalorder %s166, %s167
      %p179 = scmp.eq.s32.totalorder %s56, 3
      %p180 = por %p178, %p179
      %p182 = scmp.ne.s32.totalorder %s167, %s181
      %p183 = scmp.eq.s32.totalorder %s56, 0
      %p184 = por %p182, %p183
      %s186 = sadd.s32 %s185, 1
      %p189 = scmp.eq.s32.totalorder %s50, 3
      %p190 = scmp.ne.s32.totalorder %s185, %s187
      %p191 = scmp.eq.s32.totalorder %s50, 0
      %p192 = por %p190, %p191
      %p193 = scmp.ne.s32.totalorder %s185, %s187
      %p194 = scmp.eq.s32.totalorder %s55, 3
      %p195 = por %p193, %p194
      %p196 = scmp.ne.s32.totalorder %s187, %s188
      %p197 = scmp.eq.s32.totalorder %s55, 0
      %p198 = por %p196, %p197
      %p199 = scmp.ne.s32.totalorder %s187, %s188
      %p200 = scmp.eq.s32.totalorder %s56, 3
      %p201 = por %p199, %p200
      %p203 = scmp.ne.s32.totalorder %s188, %s202
      %p204 = scmp.eq.s32.totalorder %s56, 0
      %p205 = por %p203, %p204
      %s207 = sadd.s32 %s206, 1
      %p210 = scmp.eq.s32.totalorder %s50, 3
      %p211 = scmp.ne.s32.totalorder %s206, %s208
      %p212 = scmp.eq.s32.totalorder %s50, 0
      %p213 = por %p211, %p212
      %p214 = scmp.ne.s32.totalorder %s206, %s208
      %p215 = scmp.eq.s32.totalorder %s55, 3
      %p216 = por %p214, %p215
      %p217 = scmp.ne.s32.totalorder %s208, %s209
      %p218 = scmp.eq.s32.totalorder %s55, 0
      %p219 = por %p217, %p218
      %p220 = scmp.ne.s32.totalorder %s208, %s209
      %p221 = scmp.eq.s32.totalorder %s56, 3
      %p222 = por %p220, %p221
      %p224 = scmp.ne.s32.totalorder %s209, %s223
      %p225 = scmp.eq.s32.totalorder %s56, 0
      %p226 = por %p224, %p225
      %s228 = sadd.s32 %s227, 1
      %p231 = scmp.eq.s32.totalorder %s50, 3
      %p232 = scmp.ne.s32.totalorder %s227, %s229
      %p233 = scmp.eq.s32.totalorder %s50, 0
      %p234 = por %p232, %p233
      %p235 = scmp.ne.s32.totalorder %s227, %s229
      %p236 = scmp.eq.s32.totalorder %s55, 3
      %p237 = por %p235, %p236
      %p238 = scmp.ne.s32.totalorder %s229, %s230
      %p239 = scmp.eq.s32.totalorder %s55, 0
      %p240 = por %p238, %p239
      %p241 = scmp.ne.s32.totalorder %s229, %s230
      %p242 = scmp.eq.s32.totalorder %s56, 3
      %p243 = por %p241, %p242
      %p245 = scmp.ne.s32.totalorder %s230, %s244
      %p246 = scmp.eq.s32.totalorder %s56, 0
      %p247 = por %p245, %p246
      %s249 = sadd.s32 %s248, 1
      %p252 = scmp.eq.s32.totalorder %s50, 3
      %p253 = scmp.ne.s32.totalorder %s248, %s250
      %p254 = scmp.eq.s32.totalorder %s50, 0
      %p255 = por %p253, %p254
      %p256 = scmp.ne.s32.totalorder %s248, %s250
      %p257 = scmp.eq.s32.totalorder %s55, 3
      %p258 = por %p256, %p257
      %p259 = scmp.ne.s32.totalorder %s250, %s251
      %p260 = scmp.eq.s32.totalorder %s55, 0
      %p261 = por %p259, %p260
      %p262 = scmp.ne.s32.totalorder %s250, %s251
      %p263 = scmp.eq.s32.totalorder %s56, 3
      %p264 = por %p262, %p263
      %p266 = scmp.ne.s32.totalorder %s251, %s265
      %p267 = scmp.eq.s32.totalorder %s56, 0
      %p268 = por %p266, %p267
      %s270 = sadd.s32 %s269, 1
      %p273 = scmp.eq.s32.totalorder %s50, 3
      %p274 = scmp.ne.s32.totalorder %s269, %s271
      %p275 = scmp.eq.s32.totalorder %s50, 0
      %p276 = por %p274, %p275
      %p277 = scmp.ne.s32.totalorder %s269, %s271
      %p278 = scmp.eq.s32.totalorder %s55, 3
      %p279 = por %p277, %p278
      %p280 = scmp.ne.s32.totalorder %s271, %s272
      %p281 = scmp.eq.s32.totalorder %s55, 0
      %p282 = por %p280, %p281
      %p283 = scmp.ne.s32.totalorder %s271, %s272
      %p284 = scmp.eq.s32.totalorder %s56, 3
      %p285 = por %p283, %p284
      %p287 = scmp.ne.s32.totalorder %s272, %s286
      %p288 = scmp.eq.s32.totalorder %s56, 0
      %p289 = por %p287, %p288
      %s291 = sadd.s32 %s290, 1
      %p294 = scmp.eq.s32.totalorder %s50, 3
      %p295 = scmp.ne.s32.totalorder %s290, %s292
      %p296 = scmp.eq.s32.totalorder %s50, 0
      %p297 = por %p295, %p296
      %p298 = scmp.ne.s32.totalorder %s290, %s292
      %p299 = scmp.eq.s32.totalorder %s55, 3
      %p300 = por %p298, %p299
      %p301 = scmp.ne.s32.totalorder %s292, %s293
      %p302 = scmp.eq.s32.totalorder %s55, 0
      %p303 = por %p301, %p302
      %p304 = scmp.ne.s32.totalorder %s292, %s293
      %p305 = scmp.eq.s32.totalorder %s56, 3
      %p306 = por %p304, %p305
      %p308 = scmp.ne.s32.totalorder %s293, %s307
      %p309 = scmp.eq.s32.totalorder %s56, 0
      %p310 = por %p308, %p309
      %s312 = sadd.s32 %s311, 1
      %p315 = scmp.eq.s32.totalorder %s50, 3
      %p316 = scmp.ne.s32.totalorder %s311, %s313
      %p317 = scmp.eq.s32.totalorder %s50, 0
      %p318 = por %p316, %p317
      %p319 = scmp.ne.s32.totalorder %s311, %s313
      %p320 = scmp.eq.s32.totalorder %s55, 3
      %p321 = por %p319, %p320
      %p322 = scmp.ne.s32.totalorder %s313, %s314
      %p323 = scmp.eq.s32.totalorder %s55, 0
      %p324 = por %p322, %p323
      %p325 = scmp.ne.s32.totalorder %s313, %s314
      %p326 = scmp.eq.s32.totalorder %s56, 3
      %p327 = por %p325, %p326
      %p329 = scmp.ne.s32.totalorder %s314, %s328
      %p330 = scmp.eq.s32.totalorder %s56, 0
      %p331 = por %p329, %p330
      %s333 = sadd.s32 %s332, 1
      %p336 = scmp.eq.s32.totalorder %s50, 3
      %p337 = scmp.ne.s32.totalorder %s332, %s334
      %p338 = scmp.eq.s32.totalorder %s50, 0
      %p339 = por %p337, %p338
      %p340 = scmp.ne.s32.totalorder %s332, %s334
      %p341 = scmp.eq.s32.totalorder %s55, 3
      %p342 = por %p340, %p341
      %p343 = scmp.ne.s32.totalorder %s334, %s335
      %p344 = scmp.eq.s32.totalorder %s55, 0
      %p345 = por %p343, %p344
      %p346 = scmp.ne.s32.totalorder %s334, %s335
      %p347 = scmp.eq.s32.totalorder %s56, 3
      %p348 = por %p346, %p347
      %p350 = scmp.ne.s32.totalorder %s335, %s349
      %p351 = scmp.eq.s32.totalorder %s56, 0
      %p352 = por %p350, %p351
      %s354 = sadd.s32 %s353, 1
      %p357 = scmp.eq.s32.totalorder %s50, 3
      %p358 = scmp.ne.s32.totalorder %s353, %s355
      %p359 = scmp.eq.s32.totalorder %s50, 0
      %p360 = por %p358, %p359
      %p361 = scmp.ne.s32.totalorder %s353, %s355
      %p362 = scmp.eq.s32.totalorder %s55, 3
      %p363 = por %p361, %p362
      %p364 = scmp.ne.s32.totalorder %s355, %s356
      %p365 = scmp.eq.s32.totalorder %s55, 0
      %p366 = por %p364, %p365
      %p367 = scmp.ne.s32.totalorder %s355, %s356
      %p368 = scmp.eq.s32.totalorder %s56, 3
      %p369 = por %p367, %p368
      %p371 = scmp.ne.s32.totalorder %s356, %s370
      %p372 = scmp.eq.s32.totalorder %s56, 0
      %p373 = por %p371, %p372
      %s375 = sadd.s32 %s374, 1
      %p378 = scmp.eq.s32.totalorder %s50, 3
      %p379 = scmp.ne.s32.totalorder %s374, %s376
      %p380 = scmp.eq.s32.totalorder %s50, 0
      %p381 = por %p379, %p380
      %p382 = scmp.ne.s32.totalorder %s374, %s376
      %p383 = scmp.eq.s32.totalorder %s55, 3
      %p384 = por %p382, %p383
      %p385 = scmp.ne.s32.totalorder %s376, %s377
      %p386 = scmp.eq.s32.totalorder %s55, 0
      %p387 = por %p385, %p386
      %p388 = scmp.ne.s32.totalorder %s376, %s377
      %p389 = scmp.eq.s32.totalorder %s56, 3
      %p390 = por %p388, %p389
      %p392 = scmp.ne.s32.totalorder %s377, %s391
      %p393 = scmp.eq.s32.totalorder %s56, 0
      %p394 = por %p392, %p393
      %s396 = sadd.s32 %s395, 1
      %p399 = scmp.eq.s32.totalorder %s50, 3
      %p400 = scmp.ne.s32.totalorder %s395, %s397
      %p401 = scmp.eq.s32.totalorder %s50, 0
      %p402 = por %p400, %p401
      %p403 = scmp.ne.s32.totalorder %s395, %s397
      %p404 = scmp.eq.s32.totalorder %s55, 3
      %p405 = por %p403, %p404
      %p406 = scmp.ne.s32.totalorder %s397, %s398
      %p407 = scmp.eq.s32.totalorder %s55, 0
      %p408 = por %p406, %p407
      %p409 = scmp.ne.s32.totalorder %s397, %s398
      %p410 = scmp.eq.s32.totalorder %s56, 3
      %p411 = por %p409, %p410
      %p413 = scmp.ne.s32.totalorder %s398, %s412
      %p414 = scmp.eq.s32.totalorder %s56, 0
      %p415 = por %p413, %p414
      %s417 = sadd.s32 %s416, 1
      %p420 = scmp.eq.s32.totalorder %s50, 3
      %p421 = scmp.ne.s32.totalorder %s416, %s418
      %p422 = scmp.eq.s32.totalorder %s50, 0
      %p423 = por %p421, %p422
      %p424 = scmp.ne.s32.totalorder %s416, %s418
      %p425 = scmp.eq.s32.totalorder %s55, 3
      %p426 = por %p424, %p425
      %p427 = scmp.ne.s32.totalorder %s418, %s419
      %p428 = scmp.eq.s32.totalorder %s55, 0
      %p429 = por %p427, %p428
      %p430 = scmp.ne.s32.totalorder %s418, %s419
      %p431 = scmp.eq.s32.totalorder %s56, 3
      %p432 = por %p430, %p431
      %p434 = scmp.ne.s32.totalorder %s419, %s433
      %p435 = scmp.eq.s32.totalorder %s56, 0
      %p436 = por %p434, %p435
      %s438 = sadd.s32 %s437, 1
      %p441 = scmp.eq.s32.totalorder %s50, 3
      %p442 = scmp.ne.s32.totalorder %s437, %s439
      %p443 = scmp.eq.s32.totalorder %s50, 0
      %p444 = por %p442, %p443
      %p445 = scmp.ne.s32.totalorder %s437, %s439
      %p446 = scmp.eq.s32.totalorder %s55, 3
      %p447 = por %p445, %p446
      %p448 = scmp.ne.s32.totalorder %s439, %s440
      %p449 = scmp.eq.s32.totalorder %s55, 0
      %p450 = por %p448, %p449
      %p451 = scmp.ne.s32.totalorder %s439, %s440
      %p452 = scmp.eq.s32.totalorder %s56, 3
      %p453 = por %p451, %p452
      %p455 = scmp.ne.s32.totalorder %s440, %s454
      %p456 = scmp.eq.s32.totalorder %s56, 0
      %p457 = por %p455, %p456
      %s459 = sadd.s32 %s458, 1
      %p462 = scmp.eq.s32.totalorder %s50, 3
      %p463 = scmp.ne.s32.totalorder %s458, %s460
      %p464 = scmp.eq.s32.totalorder %s50, 0
      %p465 = por %p463, %p464
      %p466 = scmp.ne.s32.totalorder %s458, %s460
      %p467 = scmp.eq.s32.totalorder %s55, 3
      %p468 = por %p466, %p467
      %p469 = scmp.ne.s32.totalorder %s460, %s461
      %p470 = scmp.eq.s32.totalorder %s55, 0
      %p471 = por %p469, %p470
      %p472 = scmp.ne.s32.totalorder %s460, %s461
      %p473 = scmp.eq.s32.totalorder %s56, 3
      %p474 = por %p472, %p473
      %p476 = scmp.ne.s32.totalorder %s461, %s475
      %p477 = scmp.eq.s32.totalorder %s56, 0
      %p478 = por %p476, %p477
      %s480 = sadd.s32 %s479, 1
      %p483 = scmp.eq.s32.totalorder %s50, 3
      %p484 = scmp.ne.s32.totalorder %s479, %s481
      %p485 = scmp.eq.s32.totalorder %s50, 0
      %p486 = por %p484, %p485
      %p487 = scmp.ne.s32.totalorder %s479, %s481
      %p488 = scmp.eq.s32.totalorder %s55, 3
      %p489 = por %p487, %p488
      %p490 = scmp.ne.s32.totalorder %s481, %s482
      %p491 = scmp.eq.s32.totalorder %s55, 0
      %p492 = por %p490, %p491
      %p493 = scmp.ne.s32.totalorder %s481, %s482
      %p494 = scmp.eq.s32.totalorder %s56, 3
      %p495 = por %p493, %p494
      %p497 = scmp.ne.s32.totalorder %s482, %s496
      %p498 = scmp.eq.s32.totalorder %s56, 0
      %p499 = por %p497, %p498
      %s501 = sadd.s32 %s500, 1
      %p504 = scmp.eq.s32.totalorder %s50, 3
      %p505 = scmp.ne.s32.totalorder %s500, %s502
      %p506 = scmp.eq.s32.totalorder %s50, 0
      %p507 = por %p505, %p506
      %p508 = scmp.ne.s32.totalorder %s500, %s502
      %p509 = scmp.eq.s32.totalorder %s55, 3
      %p510 = por %p508, %p509
      %p511 = scmp.ne.s32.totalorder %s502, %s503
      %p512 = scmp.eq.s32.totalorder %s55, 0
      %p513 = por %p511, %p512
      %p514 = scmp.ne.s32.totalorder %s502, %s503
      %p515 = scmp.eq.s32.totalorder %s56, 3
      %p516 = por %p514, %p515
      %p518 = scmp.ne.s32.totalorder %s503, %s517
      %p519 = scmp.eq.s32.totalorder %s56, 0
      %p520 = por %p518, %p519
      %s522 = sadd.s32 %s521, 1
      %p525 = scmp.eq.s32.totalorder %s50, 3
      %p526 = scmp.ne.s32.totalorder %s521, %s523
      %p527 = scmp.eq.s32.totalorder %s50, 0
      %p528 = por %p526, %p527
      %p529 = scmp.ne.s32.totalorder %s521, %s523
      %p530 = scmp.eq.s32.totalorder %s55, 3
      %p531 = por %p529, %p530
      %p532 = scmp.ne.s32.totalorder %s523, %s524
      %p533 = scmp.eq.s32.totalorder %s55, 0
      %p534 = por %p532, %p533
      %p535 = scmp.ne.s32.totalorder %s523, %s524
      %p536 = scmp.eq.s32.totalorder %s56, 3
      %p537 = por %p535, %p536
      %p539 = scmp.ne.s32.totalorder %s524, %s538
      %p540 = scmp.eq.s32.totalorder %s56, 0
      %p541 = por %p539, %p540
      %s543 = sadd.s32 %s542, 1
      %p546 = scmp.eq.s32.totalorder %s50, 3
      %p547 = scmp.ne.s32.totalorder %s542, %s544
      %p548 = scmp.eq.s32.totalorder %s50, 0
      %p549 = por %p547, %p548
      %p550 = scmp.ne.s32.totalorder %s542, %s544
      %p551 = scmp.eq.s32.totalorder %s55, 3
      %p552 = por %p550, %p551
      %p553 = scmp.ne.s32.totalorder %s544, %s545
      %p554 = scmp.eq.s32.totalorder %s55, 0
      %p555 = por %p553, %p554
      %p556 = scmp.ne.s32.totalorder %s544, %s545
      %p557 = scmp.eq.s32.totalorder %s56, 3
      %p558 = por %p556, %p557
      %p560 = scmp.ne.s32.totalorder %s545, %s559
      %p561 = scmp.eq.s32.totalorder %s56, 0
      %p562 = por %p560, %p561
      %s564 = sadd.s32 %s563, 1
      %p567 = scmp.eq.s32.totalorder %s50, 3
      %p568 = scmp.ne.s32.totalorder %s563, %s565
      %p569 = scmp.eq.s32.totalorder %s50, 0
      %p570 = por %p568, %p569
      %p571 = scmp.ne.s32.totalorder %s563, %s565
      %p572 = scmp.eq.s32.totalorder %s55, 3
      %p573 = por %p571, %p572
      %p574 = scmp.ne.s32.totalorder %s565, %s566
      %p575 = scmp.eq.s32.totalorder %s55, 0
      %p576 = por %p574, %p575
      %p577 = scmp.ne.s32.totalorder %s565, %s566
      %p578 = scmp.eq.s32.totalorder %s56, 3
      %p579 = por %p577, %p578
      %p581 = scmp.ne.s32.totalorder %s566, %s580
      %p582 = scmp.eq.s32.totalorder %s56, 0
      %p583 = por %p581, %p582
      %s584 = ssub.s32 %s57, %s69
      %s585 = ssub.s32 %s58, %s65
      %s586 = sor.u32 %s584, %s585
      %p587 = scmp.eq.s32.totalorder %s586, 0
      %s589 = sadd.s32 %s588, 1
      %s590 = scalar_select %p587, %s588, %s589
      %p593 = pneg %p587
      %p594 = scmp.eq.s32.totalorder %s50, 3
      %p595 = por %p593, %p594
      %p596 = scmp.ne.s32.totalorder %s588, %s591
      %p597 = scmp.eq.s32.totalorder %s50, 0
      %p598 = por %p596, %p597
      %p599 = scmp.ne.s32.totalorder %s588, %s591
      %p600 = scmp.eq.s32.totalorder %s55, 3
      %p601 = por %p599, %p600
      %p602 = scmp.ne.s32.totalorder %s591, %s592
      %p603 = scmp.eq.s32.totalorder %s55, 0
      %p604 = por %p602, %p603
      %p605 = scmp.ne.s32.totalorder %s591, %s592
      %p606 = scmp.eq.s32.totalorder %s56, 3
      %p607 = por %p605, %p606
      %p609 = scmp.ne.s32.totalorder %s592, %s608
      %p610 = scmp.eq.s32.totalorder %s56, 0
      %p611 = por %p609, %p610
      %p612 = scmp.le.s32.totalorder 1, %s50
      %p613 = scmp.lt.s32.totalorder %s50, 5
      %p614 = pnand %p612, %p613
      %p615 = pneg %p614
      // Predicated region
      $region9: #{tpu_custom_call.1} parent=5 // pred_check
        _
      $region10: #{tpu_custom_call.1} parent=5 // pred_check_branch
        %617 = sbr.rel (%p614) target = $region12
      $region11: #{tpu_custom_call.1} parent=5 // pred_region
        %s618 = ssub.s32 %s50, 1
        // Predicated region
        $region13: #{tpu_custom_call.1} parent=11 // pred_check
          %p619 = pneg %p135
        $region14: #{tpu_custom_call.1} parent=11 // pred_check_branch
          %621 = sbr.rel (%p619) target = $region16
        $region15: #{tpu_custom_call.1} parent=11 // pred_region
          %s623 = ssub.s32 1024, 1024
          %624 = vsyncadd [#allocation7], %s623
          %s625 = sshll.u32 [#allocation8], 4
          %s626 = int_to_ptr.vmem [resolvable:$true] %s625
          %631 = dma.hbm_to_vmem [thread:$0]  %s2, 1024, %s626, [#allocation7], 64, 64, 4
        $region16: #{tpu_custom_call.1} parent=11 // pred_fallthru
          _
        // Predicated region
        $region17: #{tpu_custom_call.1} parent=11 // pred_check
          %p632 = pneg %p156
        $region18: #{tpu_custom_call.1} parent=11 // pred_check_branch
          %634 = sbr.rel (%p632) target = $region20
        $region19: #{tpu_custom_call.1} parent=11 // pred_region
          %s636 = ssub.s32 64, 64
          %637 = vsyncadd [#allocation10], %s636
          %s638 = sshll.u32 [#allocation9], 4
          %s639 = int_to_ptr.vmem [resolvable:$true] %s638
          %644 = dma.hbm_to_vmem [thread:$0]  %s3, 64, %s639, [#allocation10], 16, 16, 1
        $region20: #{tpu_custom_call.1} parent=11 // pred_fallthru
          _
        // Predicated region
        $region21: #{tpu_custom_call.1} parent=11 // pred_check
          %p645 = pneg %p177
        $region22: #{tpu_custom_call.1} parent=11 // pred_check_branch
          %647 = sbr.rel (%p645) target = $region24
        $region23: #{tpu_custom_call.1} parent=11 // pred_region
          %s649 = ssub.s32 1024, 1024
          %650 = vsyncadd [#allocation10], %s649
          %s651 = sshll.u32 [#allocation11], 4
          %s652 = int_to_ptr.vmem [resolvable:$true] %s651
          %657 = dma.hbm_to_vmem [thread:$0]  %s4, 1024, %s652, [#allocation10], 64, 64, 4
        $region24: #{tpu_custom_call.1} parent=11 // pred_fallthru
          _
        // Predicated region
        $region25: #{tpu_custom_call.1} parent=11 // pred_check
          %p658 = pneg %p198
        $region26: #{tpu_custom_call.1} parent=11 // pred_check_branch
          %660 = sbr.rel (%p658) target = $region28
        $region27: #{tpu_custom_call.1} parent=11 // pred_region
          %s662 = ssub.s32 64, 64
          %663 = vsyncadd [#allocation13], %s662
          %s664 = sshll.u32 [#allocation12], 4
          %s665 = int_to_ptr.vmem [resolvable:$true] %s664
          %670 = dma.hbm_to_vmem [thread:$0]  %s5, 64, %s665, [#allocation13], 16, 16, 1
        $region28: #{tpu_custom_call.1} parent=11 // pred_fallthru
          _
        // Predicated region
        $region29: #{tpu_custom_call.1} parent=11 // pred_check
          %p671 = pneg %p219
        $region30: #{tpu_custom_call.1} parent=11 // pred_check_branch
          %673 = sbr.rel (%p671) target = $region32
        $region31: #{tpu_custom_call.1} parent=11 // pred_region
          %s675 = ssub.s32 1024, 1024
          %676 = vsyncadd [#allocation13], %s675
          %s677 = sshll.u32 [#allocation14], 4
          %s678 = int_to_ptr.vmem [resolvable:$true] %s677
          %683 = dma.hbm_to_vmem [thread:$0]  %s6, 1024, %s678, [#allocation13], 64, 64, 4
        $region32: #{tpu_custom_call.1} parent=11 // pred_fallthru
          _
        // Predicated region
        $region33: #{tpu_custom_call.1} parent=11 // pred_check
          %p684 = pneg %p240
        $region34: #{tpu_custom_call.1} parent=11 // pred_check_branch
          %686 = sbr.rel (%p684) target = $region36
        $region35: #{tpu_custom_call.1} parent=11 // pred_region
          %s688 = ssub.s32 64, 64
          %689 = vsyncadd [#allocation16], %s688
          %s690 = sshll.u32 [#allocation15], 4
          %s691 = int_to_ptr.vmem [resolvable:$true] %s690
          %696 = dma.hbm_to_vmem [thread:$0]  %s7, 64, %s691, [#allocation16], 16, 16, 1
        $region36: #{tpu_custom_call.1} parent=11 // pred_fallthru
          _
        // Predicated region
        $region37: #{tpu_custom_call.1} parent=11 // pred_check
          %p697 = pneg %p261
        $region38: #{tpu_custom_call.1} parent=11 // pred_check_branch
          %699 = sbr.rel (%p697) target = $region40
        $region39: #{tpu_custom_call.1} parent=11 // pred_region
          %s701 = ssub.s32 256, 256
          %702 = vsyncadd [#allocation16], %s701
          %s703 = sshll.u32 [#allocation17], 4
          %s704 = int_to_ptr.vmem [resolvable:$true] %s703
          %709 = dma.hbm_to_vmem [thread:$0]  %s8, 256, %s704, [#allocation16], 64, 64, 4
        $region40: #{tpu_custom_call.1} parent=11 // pred_fallthru
          _
        // Predicated region
        $region41: #{tpu_custom_call.1} parent=11 // pred_check
          %p710 = pneg %p282
        $region42: #{tpu_custom_call.1} parent=11 // pred_check_branch
          %712 = sbr.rel (%p710) target = $region44
        $region43: #{tpu_custom_call.1} parent=11 // pred_region
          %s714 = ssub.s32 16, 16
          %715 = vsyncadd [#allocation19], %s714
          %s717 = sshll.u32 [#allocation18], 4
          %s718 = int_to_ptr.vmem [resolvable:$true] %s717
          %720 = dma.hbm_to_vmem [thread:$0]  %s9, 16, %s718, [#allocation19]
        $region44: #{tpu_custom_call.1} parent=11 // pred_fallthru
          _
        // Predicated region
        $region45: #{tpu_custom_call.1} parent=11 // pred_check
          %p721 = pneg %p303
        $region46: #{tpu_custom_call.1} parent=11 // pred_check_branch
          %723 = sbr.rel (%p721) target = $region48
        $region47: #{tpu_custom_call.1} parent=11 // pred_region
          %s725 = ssub.s32 1024, 1024
          %726 = vsyncadd [#allocation19], %s725
          %s727 = sshll.u32 [#allocation20], 4
          %s728 = int_to_ptr.vmem [resolvable:$true] %s727
          %733 = dma.hbm_to_vmem [thread:$0]  %s10, 1024, %s728, [#allocation19], 64, 64, 4
        $region48: #{tpu_custom_call.1} parent=11 // pred_fallthru
          _
        // Predicated region
        $region49: #{tpu_custom_call.1} parent=11 // pred_check
          %p734 = pneg %p324
        $region50: #{tpu_custom_call.1} parent=11 // pred_check_branch
          %736 = sbr.rel (%p734) target = $region52
        $region51: #{tpu_custom_call.1} parent=11 // pred_region
          %s738 = ssub.s32 64, 64
          %739 = vsyncadd [#allocation22], %s738
          %s740 = sshll.u32 [#allocation21], 4
          %s741 = int_to_ptr.vmem [resolvable:$true] %s740
          %746 = dma.hbm_to_vmem [thread:$0]  %s11, 64, %s741, [#allocation22], 16, 16, 1
        $region52: #{tpu_custom_call.1} parent=11 // pred_fallthru
          _
        // Predicated region
        $region53: #{tpu_custom_call.1} parent=11 // pred_check
          %p747 = pneg %p345
        $region54: #{tpu_custom_call.1} parent=11 // pred_check_branch
          %749 = sbr.rel (%p747) target = $region56
        $region55: #{tpu_custom_call.1} parent=11 // pred_region
          %s751 = ssub.s32 1024, 1024
          %752 = vsyncadd [#allocation22], %s751
          %s753 = sshll.u32 [#allocation23], 4
          %s754 = int_to_ptr.vmem [resolvable:$true] %s753
          %759 = dma.hbm_to_vmem [thread:$0]  %s12, 1024, %s754, [#allocation22], 64, 64, 4
        $region56: #{tpu_custom_call.1} parent=11 // pred_fallthru
          _
        // Predicated region
        $region57: #{tpu_custom_call.1} parent=11 // pred_check
          %p760 = pneg %p366
        $region58: #{tpu_custom_call.1} parent=11 // pred_check_branch
          %762 = sbr.rel (%p760) target = $region60
        $region59: #{tpu_custom_call.1} parent=11 // pred_region
          %s764 = ssub.s32 64, 64
          %765 = vsyncadd [#allocation25], %s764
          %s766 = sshll.u32 [#allocation24], 4
          %s767 = int_to_ptr.vmem [resolvable:$true] %s766
          %772 = dma.hbm_to_vmem [thread:$0]  %s13, 64, %s767, [#allocation25], 16, 16, 1
        $region60: #{tpu_custom_call.1} parent=11 // pred_fallthru
          _
        // Predicated region
        $region61: #{tpu_custom_call.1} parent=11 // pred_check
          %p773 = pneg %p387
        $region62: #{tpu_custom_call.1} parent=11 // pred_check_branch
          %775 = sbr.rel (%p773) target = $region64
        $region63: #{tpu_custom_call.1} parent=11 // pred_region
          %s777 = ssub.s32 1024, 1024
          %778 = vsyncadd [#allocation25], %s777
          %s779 = sshll.u32 [#allocation26], 4
          %s780 = int_to_ptr.vmem [resolvable:$true] %s779
          %785 = dma.hbm_to_vmem [thread:$0]  %s14, 1024, %s780, [#allocation25], 64, 64, 4
        $region64: #{tpu_custom_call.1} parent=11 // pred_fallthru
          _
        // Predicated region
        $region65: #{tpu_custom_call.1} parent=11 // pred_check
          %p786 = pneg %p408
        $region66: #{tpu_custom_call.1} parent=11 // pred_check_branch
          %788 = sbr.rel (%p786) target = $region68
        $region67: #{tpu_custom_call.1} parent=11 // pred_region
          %s790 = ssub.s32 64, 64
          %791 = vsyncadd [#allocation28], %s790
          %s792 = sshll.u32 [#allocation27], 4
          %s793 = int_to_ptr.vmem [resolvable:$true] %s792
          %798 = dma.hbm_to_vmem [thread:$0]  %s15, 64, %s793, [#allocation28], 16, 16, 1
        $region68: #{tpu_custom_call.1} parent=11 // pred_fallthru
          _
        // Predicated region
        $region69: #{tpu_custom_call.1} parent=11 // pred_check
          %p799 = pneg %p429
        $region70: #{tpu_custom_call.1} parent=11 // pred_check_branch
          %801 = sbr.rel (%p799) target = $region72
        $region71: #{tpu_custom_call.1} parent=11 // pred_region
          %s803 = ssub.s32 256, 256
          %804 = vsyncadd [#allocation28], %s803
          %s805 = sshll.u32 [#allocation29], 4
          %s806 = int_to_ptr.vmem [resolvable:$true] %s805
          %811 = dma.hbm_to_vmem [thread:$0]  %s16, 256, %s806, [#allocation28], 64, 64, 4
        $region72: #{tpu_custom_call.1} parent=11 // pred_fallthru
          _
        // Predicated region
        $region73: #{tpu_custom_call.1} parent=11 // pred_check
          %p812 = pneg %p450
        $region74: #{tpu_custom_call.1} parent=11 // pred_check_branch
          %814 = sbr.rel (%p812) target = $region76
        $region75: #{tpu_custom_call.1} parent=11 // pred_region
          %s816 = ssub.s32 16, 16
          %817 = vsyncadd [#allocation31], %s816
          %s819 = sshll.u32 [#allocation30], 4
          %s820 = int_to_ptr.vmem [resolvable:$true] %s819
          %822 = dma.hbm_to_vmem [thread:$0]  %s17, 16, %s820, [#allocation31]
        $region76: #{tpu_custom_call.1} parent=11 // pred_fallthru
          _
        // Predicated region
        $region77: #{tpu_custom_call.1} parent=11 // pred_check
          %p823 = pneg %p471
        $region78: #{tpu_custom_call.1} parent=11 // pred_check_branch
          %825 = sbr.rel (%p823) target = $region80
        $region79: #{tpu_custom_call.1} parent=11 // pred_region
          %s827 = ssub.s32 256, 256
          %828 = vsyncadd [#allocation31], %s827
          %s829 = sshll.u32 [#allocation32], 4
          %s830 = int_to_ptr.vmem [resolvable:$true] %s829
          %835 = dma.hbm_to_vmem [thread:$0]  %s18, 256, %s830, [#allocation31], 64, 64, 4
        $region80: #{tpu_custom_call.1} parent=11 // pred_fallthru
          _
        // Predicated region
        $region81: #{tpu_custom_call.1} parent=11 // pred_check
          %p836 = pneg %p492
        $region82: #{tpu_custom_call.1} parent=11 // pred_check_branch
          %838 = sbr.rel (%p836) target = $region84
        $region83: #{tpu_custom_call.1} parent=11 // pred_region
          %s840 = ssub.s32 16, 16
          %841 = vsyncadd [#allocation34], %s840
          %s843 = sshll.u32 [#allocation33], 4
          %s844 = int_to_ptr.vmem [resolvable:$true] %s843
          %846 = dma.hbm_to_vmem [thread:$0]  %s19, 16, %s844, [#allocation34]
        $region84: #{tpu_custom_call.1} parent=11 // pred_fallthru
          _
        // Predicated region
        $region85: #{tpu_custom_call.1} parent=11 // pred_check
          %p847 = pneg %p513
        $region86: #{tpu_custom_call.1} parent=11 // pred_check_branch
          %849 = sbr.rel (%p847) target = $region88
        $region87: #{tpu_custom_call.1} parent=11 // pred_region
          %s851 = ssub.s32 512, 512
          %852 = vsyncadd [#allocation34], %s851
          %s853 = sshll.u32 [#allocation35], 4
          %s854 = int_to_ptr.vmem [resolvable:$true] %s853
          %859 = dma.hbm_to_vmem [thread:$0]  %s20, 512, %s854, [#allocation34], 64, 64, 4
        $region88: #{tpu_custom_call.1} parent=11 // pred_fallthru
          _
        // Predicated region
        $region89: #{tpu_custom_call.1} parent=11 // pred_check
          %p860 = pneg %p534
        $region90: #{tpu_custom_call.1} parent=11 // pred_check_branch
          %862 = sbr.rel (%p860) target = $region92
        $region91: #{tpu_custom_call.1} parent=11 // pred_region
          %s864 = ssub.s32 16, 16
          %865 = vsyncadd [#allocation37], %s864
          %s867 = sshll.u32 [#allocation36], 4
          %s868 = int_to_ptr.vmem [resolvable:$true] %s867
          %870 = dma.hbm_to_vmem [thread:$0]  %s21, 16, %s868, [#allocation37]
        $region92: #{tpu_custom_call.1} parent=11 // pred_fallthru
          _
        // Predicated region
        $region93: #{tpu_custom_call.1} parent=11 // pred_check
          %p871 = pneg %p555
        $region94: #{tpu_custom_call.1} parent=11 // pred_check_branch
          %873 = sbr.rel (%p871) target = $region96
        $region95: #{tpu_custom_call.1} parent=11 // pred_region
          %s875 = ssub.s32 16, 16
          %876 = vsyncadd [#allocation37], %s875
          %s878 = sshll.u32 [#allocation38], 4
          %s879 = int_to_ptr.vmem [resolvable:$true] %s878
          %881 = dma.hbm_to_vmem [thread:$0]  %s22, 16, %s879, [#allocation37]
        $region96: #{tpu_custom_call.1} parent=11 // pred_fallthru
          _
        // Predicated region
        $region97: #{tpu_custom_call.1} parent=11 // pred_check
          %p882 = pneg %p576
        $region98: #{tpu_custom_call.1} parent=11 // pred_check_branch
          %884 = sbr.rel (%p882) target = $region100
        $region99: #{tpu_custom_call.1} parent=11 // pred_region
          %s886 = ssub.s32 16, 16
          %887 = vsyncadd [#allocation40], %s886
          %s889 = sshll.u32 [#allocation39], 4
          %s890 = int_to_ptr.vmem [resolvable:$true] %s889
          %892 = dma.hbm_to_vmem [thread:$0]  %s23, 16, %s890, [#allocation40]
        $region100: #{tpu_custom_call.1} parent=11 // pred_fallthru
          _
      $region12: #{tpu_custom_call.1} parent=5 // pred_fallthru
        _
      %p893 = scmp.lt.s32.totalorder %s50, 4
      // Predicated region
      $region101: #{tpu_custom_call.1} parent=5 // pred_check
        %p894 = pneg %p893
      $region102: #{tpu_custom_call.1} parent=5 // pred_check_branch
        %896 = sbr.rel (%p894) target = $region104
      $region103: #{tpu_custom_call.1} parent=5 // pred_region
        // Predicated region
        $region105: #{tpu_custom_call.1} parent=103 // pred_check
          %p897 = pneg %p82
        $region106: #{tpu_custom_call.1} parent=103 // pred_check_branch
          %899 = sbr.rel (%p897) target = $region108
        $region107: #{tpu_custom_call.1} parent=103 // pred_region
          %s900 = sand.u32 %s72, 1
          %s901 = scalar_lea.sflag [#allocation4], %s900
          %s902 = sand.u32 %s72, 1
          %s903 = smul.addr %s902, 16
          %s904 = scalar_lea.vmem [#allocation3], %s903
          %s906 = ssub.s32 256, 256
          %907 = vsyncadd %s901, %s906
          %s908 = smul.addr %s57, 2
          %s909 = smul.addr %s908, 128
          %s910 = scalar_lea.hbm %s0, %s909
          %s911 = sshll.u32 %s904, 4
          %s912 = int_to_ptr.vmem [resolvable:$true] %s911
          %917 = dma.hbm_to_vmem [thread:$0]  %s910, 256, %s912, %s901, 128, 128, 8
        $region108: #{tpu_custom_call.1} parent=103 // pred_fallthru
          _
        // Predicated region
        $region109: #{tpu_custom_call.1} parent=103 // pred_check
          %p918 = pneg %p108
        $region110: #{tpu_custom_call.1} parent=103 // pred_check_branch
          %920 = sbr.rel (%p918) target = $region112
        $region111: #{tpu_custom_call.1} parent=103 // pred_region
          %s921 = sand.u32 %s50, 1
          %s922 = scalar_lea.sflag [#allocation7], %s921
          %s923 = sand.u32 %s98, 1
          %s924 = smul.addr %s923, 8
          %s925 = scalar_lea.vmem [#allocation6], %s924
          %s927 = ssub.s32 128, 128
          %928 = vsyncadd %s922, %s927
          %s929 = smul.addr %s57, 128
          %s930 = scalar_lea.hbm %s1, %s929
          %s932 = sshll.u32 %s925, 4
          %s933 = int_to_ptr.vmem [resolvable:$true] %s932
          %935 = dma.hbm_to_vmem [thread:$0]  %s930, 128, %s933, %s922
        $region112: #{tpu_custom_call.1} parent=103 // pred_fallthru
          _
      $region104: #{tpu_custom_call.1} parent=5 // pred_fallthru
        _
      %p936 = scmp.le.s32.totalorder 1, %s50
      %p937 = scmp.lt.s32.totalorder %s50, 5
      %p938 = pnand %p936, %p937
      %p939 = pneg %p938
      // Predicated region
      $region113: #{tpu_custom_call.1} parent=5 // pred_check
        _
      $region114: #{tpu_custom_call.1} parent=5 // pred_check_branch
        %941 = sbr.rel (%p938) target = $region116
      $region115: #{tpu_custom_call.1} parent=5 // pred_region
        %s942 = ssub.s32 %s50, 1
        %s943 = sand.u32 %s75, 1
        %s944 = scalar_lea.sflag [#allocation4], %s943
        %s945 = sand.u32 %s75, 1
        %s946 = smul.addr %s945, 16
        %s947 = scalar_lea.vmem [#allocation3], %s946
        // Predicated region
        $region117: #{tpu_custom_call.1} parent=115 // pred_check
          %p948 = pneg %p88
        $region118: #{tpu_custom_call.1} parent=115 // pred_check_branch
          %950 = sbr.rel (%p948) target = $region120
        $region119: #{tpu_custom_call.1} parent=115 // pred_region
          %951 = dma.done %s944, 256
        $region120: #{tpu_custom_call.1} parent=115 // pred_fallthru
          _
        %s952 = sand.u32 %s55, 1
        %s953 = scalar_lea.sflag [#allocation7], %s952
        %s954 = sand.u32 %s101, 1
        %s955 = smul.addr %s954, 8
        %s956 = scalar_lea.vmem [#allocation6], %s955
        // Predicated region
        $region121: #{tpu_custom_call.1} parent=115 // pred_check
          %p957 = pneg %p114
        $region122: #{tpu_custom_call.1} parent=115 // pred_check_branch
          %959 = sbr.rel (%p957) target = $region124
        $region123: #{tpu_custom_call.1} parent=115 // pred_region
          %960 = dma.done %s953, 128
        $region124: #{tpu_custom_call.1} parent=115 // pred_fallthru
          _
        // Predicated region
        $region125: #{tpu_custom_call.1} parent=115 // pred_check
          %p961 = pneg %p135
        $region126: #{tpu_custom_call.1} parent=115 // pred_check_branch
          %963 = sbr.rel (%p961) target = $region128
        $region127: #{tpu_custom_call.1} parent=115 // pred_region
          %964 = dma.done [#allocation7], 1024
        $region128: #{tpu_custom_call.1} parent=115 // pred_fallthru
          _
        // Predicated region
        $region129: #{tpu_custom_call.1} parent=115 // pred_check
          %p965 = pneg %p156
        $region130: #{tpu_custom_call.1} parent=115 // pred_check_branch
          %967 = sbr.rel (%p965) target = $region132
        $region131: #{tpu_custom_call.1} parent=115 // pred_region
          %968 = dma.done [#allocation10], 64
        $region132: #{tpu_custom_call.1} parent=115 // pred_fallthru
          _
        // Predicated region
        $region133: #{tpu_custom_call.1} parent=115 // pred_check
          %p969 = pneg %p177
        $region134: #{tpu_custom_call.1} parent=115 // pred_check_branch
          %971 = sbr.rel (%p969) target = $region136
        $region135: #{tpu_custom_call.1} parent=115 // pred_region
          %972 = dma.done [#allocation10], 1024
        $region136: #{tpu_custom_call.1} parent=115 // pred_fallthru
          _
        // Predicated region
        $region137: #{tpu_custom_call.1} parent=115 // pred_check
          %p973 = pneg %p198
        $region138: #{tpu_custom_call.1} parent=115 // pred_check_branch
          %975 = sbr.rel (%p973) target = $region140
        $region139: #{tpu_custom_call.1} parent=115 // pred_region
          %976 = dma.done [#allocation13], 64
        $region140: #{tpu_custom_call.1} parent=115 // pred_fallthru
          _
        // Predicated region
        $region141: #{tpu_custom_call.1} parent=115 // pred_check
          %p977 = pneg %p219
        $region142: #{tpu_custom_call.1} parent=115 // pred_check_branch
          %979 = sbr.rel (%p977) target = $region144
        $region143: #{tpu_custom_call.1} parent=115 // pred_region
          %980 = dma.done [#allocation13], 1024
        $region144: #{tpu_custom_call.1} parent=115 // pred_fallthru
          _
        // Predicated region
        $region145: #{tpu_custom_call.1} parent=115 // pred_check
          %p981 = pneg %p240
        $region146: #{tpu_custom_call.1} parent=115 // pred_check_branch
          %983 = sbr.rel (%p981) target = $region148
        $region147: #{tpu_custom_call.1} parent=115 // pred_region
          %984 = dma.done [#allocation16], 64
        $region148: #{tpu_custom_call.1} parent=115 // pred_fallthru
          _
        // Predicated region
        $region149: #{tpu_custom_call.1} parent=115 // pred_check
          %p985 = pneg %p261
        $region150: #{tpu_custom_call.1} parent=115 // pred_check_branch
          %987 = sbr.rel (%p985) target = $region152
        $region151: #{tpu_custom_call.1} parent=115 // pred_region
          %988 = dma.done [#allocation16], 256
        $region152: #{tpu_custom_call.1} parent=115 // pred_fallthru
          _
        // Predicated region
        $region153: #{tpu_custom_call.1} parent=115 // pred_check
          %p989 = pneg %p282
        $region154: #{tpu_custom_call.1} parent=115 // pred_check_branch
          %991 = sbr.rel (%p989) target = $region156
        $region155: #{tpu_custom_call.1} parent=115 // pred_region
          %992 = dma.done [#allocation19], 16
        $region156: #{tpu_custom_call.1} parent=115 // pred_fallthru
          _
        // Predicated region
        $region157: #{tpu_custom_call.1} parent=115 // pred_check
          %p993 = pneg %p303
        $region158: #{tpu_custom_call.1} parent=115 // pred_check_branch
          %995 = sbr.rel (%p993) target = $region160
        $region159: #{tpu_custom_call.1} parent=115 // pred_region
          %996 = dma.done [#allocation19], 1024
        $region160: #{tpu_custom_call.1} parent=115 // pred_fallthru
          _
        // Predicated region
        $region161: #{tpu_custom_call.1} parent=115 // pred_check
          %p997 = pneg %p324
        $region162: #{tpu_custom_call.1} parent=115 // pred_check_branch
          %999 = sbr.rel (%p997) target = $region164
        $region163: #{tpu_custom_call.1} parent=115 // pred_region
          %1000 = dma.done [#allocation22], 64
        $region164: #{tpu_custom_call.1} parent=115 // pred_fallthru
          _
        // Predicated region
        $region165: #{tpu_custom_call.1} parent=115 // pred_check
          %p1001 = pneg %p345
        $region166: #{tpu_custom_call.1} parent=115 // pred_check_branch
          %1003 = sbr.rel (%p1001) target = $region168
        $region167: #{tpu_custom_call.1} parent=115 // pred_region
          %1004 = dma.done [#allocation22], 1024
        $region168: #{tpu_custom_call.1} parent=115 // pred_fallthru
          _
        // Predicated region
        $region169: #{tpu_custom_call.1} parent=115 // pred_check
          %p1005 = pneg %p366
        $region170: #{tpu_custom_call.1} parent=115 // pred_check_branch
          %1007 = sbr.rel (%p1005) target = $region172
        $region171: #{tpu_custom_call.1} parent=115 // pred_region
          %1008 = dma.done [#allocation25], 64
        $region172: #{tpu_custom_call.1} parent=115 // pred_fallthru
          _
        // Predicated region
        $region173: #{tpu_custom_call.1} parent=115 // pred_check
          %p1009 = pneg %p387
        $region174: #{tpu_custom_call.1} parent=115 // pred_check_branch
          %1011 = sbr.rel (%p1009) target = $region176
        $region175: #{tpu_custom_call.1} parent=115 // pred_region
          %1012 = dma.done [#allocation25], 1024
        $region176: #{tpu_custom_call.1} parent=115 // pred_fallthru
          _
        // Predicated region
        $region177: #{tpu_custom_call.1} parent=115 // pred_check
          %p1013 = pneg %p408
        $region178: #{tpu_custom_call.1} parent=115 // pred_check_branch
          %1015 = sbr.rel (%p1013) target = $region180
        $region179: #{tpu_custom_call.1} parent=115 // pred_region
          %1016 = dma.done [#allocation28], 64
        $region180: #{tpu_custom_call.1} parent=115 // pred_fallthru
          _
        // Predicated region
        $region181: #{tpu_custom_call.1} parent=115 // pred_check
          %p1017 = pneg %p429
        $region182: #{tpu_custom_call.1} parent=115 // pred_check_branch
          %1019 = sbr.rel (%p1017) target = $region184
        $region183: #{tpu_custom_call.1} parent=115 // pred_region
          %1020 = dma.done [#allocation28], 256
        $region184: #{tpu_custom_call.1} parent=115 // pred_fallthru
          _
        // Predicated region
        $region185: #{tpu_custom_call.1} parent=115 // pred_check
          %p1021 = pneg %p450
        $region186: #{tpu_custom_call.1} parent=115 // pred_check_branch
          %1023 = sbr.rel (%p1021) target = $region188
        $region187: #{tpu_custom_call.1} parent=115 // pred_region
          %1024 = dma.done [#allocation31], 16
        $region188: #{tpu_custom_call.1} parent=115 // pred_fallthru
          _
        // Predicated region
        $region189: #{tpu_custom_call.1} parent=115 // pred_check
          %p1025 = pneg %p471
        $region190: #{tpu_custom_call.1} parent=115 // pred_check_branch
          %1027 = sbr.rel (%p1025) target = $region192
        $region191: #{tpu_custom_call.1} parent=115 // pred_region
          %1028 = dma.done [#allocation31], 256
        $region192: #{tpu_custom_call.1} parent=115 // pred_fallthru
          _
        // Predicated region
        $region193: #{tpu_custom_call.1} parent=115 // pred_check
          %p1029 = pneg %p492
        $region194: #{tpu_custom_call.1} parent=115 // pred_check_branch
          %1031 = sbr.rel (%p1029) target = $region196
        $region195: #{tpu_custom_call.1} parent=115 // pred_region
          %1032 = dma.done [#allocation34], 16
        $region196: #{tpu_custom_call.1} parent=115 // pred_fallthru
          _
        // Predicated region
        $region197: #{tpu_custom_call.1} parent=115 // pred_check
          %p1033 = pneg %p513
        $region198: #{tpu_custom_call.1} parent=115 // pred_check_branch
          %1035 = sbr.rel (%p1033) target = $region200
        $region199: #{tpu_custom_call.1} parent=115 // pred_region
          %1036 = dma.done [#allocation34], 512
        $region200: #{tpu_custom_call.1} parent=115 // pred_fallthru
          _
        // Predicated region
        $region201: #{tpu_custom_call.1} parent=115 // pred_check
          %p1037 = pneg %p534
        $region202: #{tpu_custom_call.1} parent=115 // pred_check_branch
          %1039 = sbr.rel (%p1037) target = $region204
        $region203: #{tpu_custom_call.1} parent=115 // pred_region
          %1040 = dma.done [#allocation37], 16
        $region204: #{tpu_custom_call.1} parent=115 // pred_fallthru
          _
        // Predicated region
        $region205: #{tpu_custom_call.1} parent=115 // pred_check
          %p1041 = pneg %p555
        $region206: #{tpu_custom_call.1} parent=115 // pred_check_branch
          %1043 = sbr.rel (%p1041) target = $region208
        $region207: #{tpu_custom_call.1} parent=115 // pred_region
          %1044 = dma.done [#allocation37], 16
        $region208: #{tpu_custom_call.1} parent=115 // pred_fallthru
          _
        // Predicated region
        $region209: #{tpu_custom_call.1} parent=115 // pred_check
          %p1045 = pneg %p576
        $region210: #{tpu_custom_call.1} parent=115 // pred_check_branch
          %1047 = sbr.rel (%p1045) target = $region212
        $region211: #{tpu_custom_call.1} parent=115 // pred_region
          %1048 = dma.done [#allocation40], 16
        $region212: #{tpu_custom_call.1} parent=115 // pred_fallthru
          _
        %s1049 = sand.u32 %s75, 1
        %s1050 = scalar_lea.sflag [#allocation4], %s1049
        %s1051 = sand.u32 %s75, 1
        %s1052 = smul.addr %s1051, 16
        %s1053 = scalar_lea.vmem [#allocation3], %s1052
        %p1054 = pneg %p88
        %p1055 = pneg %p85
        %s1056 = sand.u32 %s55, 1
        %s1057 = scalar_lea.sflag [#allocation7], %s1056
        %s1058 = sand.u32 %s101, 1
        %s1059 = smul.addr %s1058, 8
        %s1060 = scalar_lea.vmem [#allocation6], %s1059
        %p1061 = pneg %p114
        %p1062 = pneg %p111
        %p1063 = pneg %p135
        %p1064 = pneg %p132
        %p1065 = pneg %p156
        %p1066 = pneg %p153
        %p1067 = pneg %p177
        %p1068 = pneg %p174
        %p1069 = pneg %p198
        %p1070 = pneg %p195
        %p1071 = pneg %p219
        %p1072 = pneg %p216
        %p1073 = pneg %p240
        %p1074 = pneg %p237
        %p1075 = pneg %p261
        %p1076 = pneg %p258
        %p1077 = pneg %p282
        %p1078 = pneg %p279
        %p1079 = pneg %p303
        %p1080 = pneg %p300
        %p1081 = pneg %p324
        %p1082 = pneg %p321
        %p1083 = pneg %p345
        %p1084 = pneg %p342
        %p1085 = pneg %p366
        %p1086 = pneg %p363
        %p1087 = pneg %p387
        %p1088 = pneg %p384
        %p1089 = pneg %p408
        %p1090 = pneg %p405
        %p1091 = pneg %p429
        %p1092 = pneg %p426
        %p1093 = pneg %p450
        %p1094 = pneg %p447
        %p1095 = pneg %p471
        %p1096 = pneg %p468
        %p1097 = pneg %p492
        %p1098 = pneg %p489
        %p1099 = pneg %p513
        %p1100 = pneg %p510
        %p1101 = pneg %p534
        %p1102 = pneg %p531
        %p1103 = pneg %p555
        %p1104 = pneg %p552
        %p1105 = pneg %p576
        %p1106 = pneg %p573
        %p1107 = pneg %p604
        %p1108 = pneg %p601
        %s1109 = sand.u32 %s591, 1
        %s1110 = scalar_lea.sflag [#allocation5], %s1109
        %s1111 = sand.u32 %s591, 1
        %s1112 = smul.addr %s1111, 8
        %s1113 = scalar_lea.vmem [#allocation41], %s1112
        %s1115 = smul.u32 %s60, 8
        %v1116 = vld [vmem:[%s947] sm:$0xff]
        %v1117 = vld [vmem:[%s947 + $0x8] sm:$0xff]
        %s1118 = scalar_lea.vmem %s947, %s1115 [#allocation3]
        %v1119 = vld [vmem:[%s1118] sm:$0xff]
        %v1120 = vld [vmem:[#allocation38] sm:$0x1]
        %v1121 = vld [vmem:[#allocation39] sm:$0x1]
        %v1122 = vlaneseq
        %v1123 = vshrl.u32 %v1122, 7
        %v1124 = vstv %s1115
        %v1125 = vadd.s32 %v1124, %v1123
        %v1126 = vlaneseq
        %v1127 = vand.u32 %v1126, 127
        %vm1128 = vcmp.le.s32.totalorder %v1127, %v1125
        %v1129 = vsel %vm1128, 0.0, -1e+09
        %v1130 = vpack.c.bf16 %v1119, %v1119
        %v1131 = vpack.c.bf16 %v1117, %v1116
        loop: start=0, step=1, limit=4
        $region213: #{tpu_custom_call.1} parent=115 // loop_pre_header
          _
        $region214: #{tpu_custom_call.1} parent=115 // loop_header
          %s1133 = sphi 0, %s1137
          %p1134 = scmp.ge.s32.totalorder %s1133, 4
        $region215: #{tpu_custom_call.1} parent=115 // loop_header_branch
          %1136 = sbr.rel (%p1134) target = $region219
        $region216: #{tpu_custom_call.1} parent=115 // loop_body
          %s1138 = smul.u32 %s1133, 4
          %s1139 = smul.addr %s1138, 4
          %s1140 = scalar_lea.vmem [#allocation8], %s1139
          %v1141 = vld [vmem:[%s1140] sm:$0xf]
          %v1142 = vld [vmem:[%s1140 + $0x4] sm:$0xf]
          %v1143 = vld [vmem:[%s1140 + $0x8] sm:$0xf]
          %v1144 = vld [vmem:[%s1140 + $0xc] sm:$0xf]
          %s1145 = scalar_lea.vmem [#allocation9], %s1133
          %v1146 = vld [vmem:[%s1145] sm:$0x1]
          %v1148 = vlaneseq
          %v1149 = vshrl.u32 %v1148, 7
          %v1150 = vsub.s32 0, %v1149
          %v1151 = vrot.slane %v1146, %v1150
          %v1157 = vunpack.c.l.b16 %v1141
          %v1158 = vunpack.c.l.b16 %v1142
          %v1159 = vunpack.c.l.b16 %v1143
          %v1160 = vunpack.c.l.b16 %v1144
          %v1161 = vpack.c.b16 %v1158, %v1157
          %v1162 = vpack.c.b16 %v1160, %v1159
          %vm1165 = vcmask 261120
          %v1167 = vsel %vm1165, %v1130, 0
          %1169 = vmatprep.subr.bf16.mxu0 0
          %1170 = vmatpush1.bf16.msra.mxu0 %v1161
          %1171 = vmatprep.subr.bf16.mxu0 0
          %1172 = vmatpush1.bf16.msra.mxu0 %v1162
          %1173 = vmatprep.subr.bf16.mxu0 0
          %1174 = vmatpush1.bf16.msra.mxu0 0
          %1175 = vmatprep.subr.bf16.mxu0 0
          %1176 = vmatpush1.bf16.msra.mxu0 0
          %1177 = vmatprep.subr.bf16.mxu0 0
          %1178 = vmatpush1.bf16.msra.mxu0 0
          %1179 = vmatprep.subr.bf16.mxu0 0
          %1180 = vmatpush1.bf16.msra.mxu0 0
          %1181 = vmatprep.subr.bf16.mxu0 0
          %1182 = vmatpush1.bf16.msra.mxu0 0
          %1183 = vmatprep.subr.bf16.mxu0 0
          %1184 = vmatpush1.bf16.msra.mxu0 0
          %1185 = vmatprep.subr.bf16.mxu0 0
          %1186 = vmatpush1.bf16.msra.mxu0 0
          %1187 = vmatprep.subr.bf16.mxu0 0
          %1188 = vmatpush1.bf16.msra.mxu0 0
          %1189 = vmatprep.subr.bf16.mxu0 0
          %1190 = vmatpush1.bf16.msra.mxu0 0
          %1191 = vmatprep.subr.bf16.mxu0 0
          %1192 = vmatpush1.bf16.msra.mxu0 0
          %1193 = vmatprep.subr.bf16.mxu0 0
          %1194 = vmatpush1.bf16.msra.mxu0 0
          %1195 = vmatprep.subr.bf16.mxu0 0
          %1196 = vmatpush1.bf16.msra.mxu0 0
          %1197 = vmatprep.subr.bf16.mxu0 0
          %1198 = vmatpush1.bf16.msra.mxu0 0
          %1199 = vmatprep.subr.bf16.mxu0 0
          %1200 = vmatpush1.bf16.msra.mxu0 0
          %1201 = vmatprep.mubr.bf16.mxu0 0
          %1202 = vmatmul.mubr.bf16.gmra.mrb[0].mxu0 %v1167
          %v1203 = vpop.f32.mrb[0].mxu0
          %v1204 = vadd.f32 %v1151, %v1203
          %v1205 = vpop.f32.mrb[0].mxu0
          %v1206 = vpop.f32.mrb[0].mxu0
          %v1207 = vpop.f32.mrb[0].mxu0
          %1208 = vdwg.mxu0
          %s1209 = smul.addr %s1138, 4
          %s1210 = scalar_lea.vmem [#allocation11], %s1209
          %v1211 = vld [vmem:[%s1210] sm:$0xf]
          %v1212 = vld [vmem:[%s1210 + $0x4] sm:$0xf]
          %v1213 = vld [vmem:[%s1210 + $0x8] sm:$0xf]
          %v1214 = vld [vmem:[%s1210 + $0xc] sm:$0xf]
          %s1215 = scalar_lea.vmem [#allocation12], %s1133
          %v1216 = vld [vmem:[%s1215] sm:$0x1]
          %v1218 = vlaneseq
          %v1219 = vshrl.u32 %v1218, 7
          %v1220 = vsub.s32 0, %v1219
          %v1221 = vrot.slane %v1216, %v1220
          %v1227 = vunpack.c.l.b16 %v1211
          %v1228 = vunpack.c.l.b16 %v1212
          %v1229 = vunpack.c.l.b16 %v1213
          %v1230 = vunpack.c.l.b16 %v1214
          %v1231 = vpack.c.b16 %v1228, %v1227
          %v1232 = vpack.c.b16 %v1230, %v1229
          %v1236 = vsel %vm1165, %v1131, 0
          %1238 = vmatprep.subr.bf16.mxu0 0
          %1239 = vmatpush1.bf16.msra.mxu0 %v1231
          %1240 = vmatprep.subr.bf16.mxu0 0
          %1241 = vmatpush1.bf16.msra.mxu0 %v1232
          %1242 = vmatprep.subr.bf16.mxu0 0
          %1243 = vmatpush1.bf16.msra.mxu0 0
          %1244 = vmatprep.subr.bf16.mxu0 0
          %1245 = vmatpush1.bf16.msra.mxu0 0
          %1246 = vmatprep.subr.bf16.mxu0 0
          %1247 = vmatpush1.bf16.msra.mxu0 0
          %1248 = vmatprep.subr.bf16.mxu0 0
          %1249 = vmatpush1.bf16.msra.mxu0 0
          %1250 = vmatprep.subr.bf16.mxu0 0
          %1251 = vmatpush1.bf16.msra.mxu0 0
          %1252 = vmatprep.subr.bf16.mxu0 0
          %1253 = vmatpush1.bf16.msra.mxu0 0
          %1254 = vmatprep.subr.bf16.mxu0 0
          %1255 = vmatpush1.bf16.msra.mxu0 0
          %1256 = vmatprep.subr.bf16.mxu0 0
          %1257 = vmatpush1.bf16.msra.mxu0 0
          %1258 = vmatprep.subr.bf16.mxu0 0
          %1259 = vmatpush1.bf16.msra.mxu0 0
          %1260 = vmatprep.subr.bf16.mxu0 0
          %1261 = vmatpush1.bf16.msra.mxu0 0
          %1262 = vmatprep.subr.bf16.mxu0 0
          %1263 = vmatpush1.bf16.msra.mxu0 0
          %1264 = vmatprep.subr.bf16.mxu0 0
          %1265 = vmatpush1.bf16.msra.mxu0 0
          %1266 = vmatprep.subr.bf16.mxu0 0
          %1267 = vmatpush1.bf16.msra.mxu0 0
          %1268 = vmatprep.subr.bf16.mxu0 0
          %1269 = vmatpush1.bf16.msra.mxu0 0
          %1270 = vmatprep.mubr.bf16.mxu0 0
          %1271 = vmatmul.mubr.bf16.gmra.mrb[0].mxu0 %v1236
          %v1272 = vpop.f32.mrb[0].mxu0
          %v1273 = vadd.f32 %v1221, %v1272
          %v1274 = vpop.f32.mrb[0].mxu0
          %v1275 = vpop.f32.mrb[0].mxu0
          %v1276 = vadd.f32 %v1221, %v1275
          %v1277 = vpop.f32.mrb[0].mxu0
          %1278 = vdwg.mxu0
          %s1279 = smul.addr %s1138, 4
          %s1280 = scalar_lea.vmem [#allocation14], %s1279
          %v1281 = vld [vmem:[%s1280] sm:$0xf]
          %v1282 = vld [vmem:[%s1280 + $0x4] sm:$0xf]
          %v1283 = vld [vmem:[%s1280 + $0x8] sm:$0xf]
          %v1284 = vld [vmem:[%s1280 + $0xc] sm:$0xf]
          %s1285 = scalar_lea.vmem [#allocation15], %s1133
          %v1286 = vld [vmem:[%s1285] sm:$0x1]
          %v1288 = vlaneseq
          %v1289 = vshrl.u32 %v1288, 7
          %v1290 = vsub.s32 0, %v1289
          %v1291 = vrot.slane %v1286, %v1290
          %v1297 = vunpack.c.l.b16 %v1281
          %v1298 = vunpack.c.l.b16 %v1282
          %v1299 = vunpack.c.l.b16 %v1283
          %v1300 = vunpack.c.l.b16 %v1284
          %v1301 = vpack.c.b16 %v1298, %v1297
          %v1302 = vpack.c.b16 %v1300, %v1299
          %1305 = vmatprep.subr.bf16.mxu0 0
          %1306 = vmatpush1.bf16.msra.mxu0 %v1301
          %1307 = vmatprep.subr.bf16.mxu0 0
          %1308 = vmatpush1.bf16.msra.mxu0 %v1302
          %1309 = vmatprep.subr.bf16.mxu0 0
          %1310 = vmatpush1.bf16.msra.mxu0 0
          %1311 = vmatprep.subr.bf16.mxu0 0
          %1312 = vmatpush1.bf16.msra.mxu0 0
          %1313 = vmatprep.subr.bf16.mxu0 0
          %1314 = vmatpush1.bf16.msra.mxu0 0
          %1315 = vmatprep.subr.bf16.mxu0 0
          %1316 = vmatpush1.bf16.msra.mxu0 0
          %1317 = vmatprep.subr.bf16.mxu0 0
          %1318 = vmatpush1.bf16.msra.mxu0 0
          %1319 = vmatprep.subr.bf16.mxu0 0
          %1320 = vmatpush1.bf16.msra.mxu0 0
          %1321 = vmatprep.subr.bf16.mxu0 0
          %1322 = vmatpush1.bf16.msra.mxu0 0
          %1323 = vmatprep.subr.bf16.mxu0 0
          %1324 = vmatpush1.bf16.msra.mxu0 0
          %1325 = vmatprep.subr.bf16.mxu0 0
          %1326 = vmatpush1.bf16.msra.mxu0 0
          %1327 = vmatprep.subr.bf16.mxu0 0
          %1328 = vmatpush1.bf16.msra.mxu0 0
          %1329 = vmatprep.subr.bf16.mxu0 0
          %1330 = vmatpush1.bf16.msra.mxu0 0
          %1331 = vmatprep.subr.bf16.mxu0 0
          %1332 = vmatpush1.bf16.msra.mxu0 0
          %1333 = vmatprep.subr.bf16.mxu0 0
          %1334 = vmatpush1.bf16.msra.mxu0 0
          %1335 = vmatprep.subr.bf16.mxu0 0
          %1336 = vmatpush1.bf16.msra.mxu0 0
          %1337 = vmatprep.mubr.bf16.mxu0 0
          %1338 = vmatmul.mubr.bf16.gmra.mrb[0].mxu0 %v1236
          %v1339 = vpop.f32.mrb[0].mxu0
          %v1340 = vadd.f32 %v1291, %v1339
          %v1341 = vpop.f32.mrb[0].mxu0
          %v1342 = vpop.f32.mrb[0].mxu0
          %v1343 = vadd.f32 %v1291, %v1342
          %v1344 = vpop.f32.mrb[0].mxu0
          %1345 = vdwg.mxu0
          %v1346 = vpack.c.bf16 %v1204, %v1204
          %v1347 = vpack.c.bf16 %v1276, %v1273
          %vm1348 = vcmask 64512
          %v1350 = vsel %vm1348, %v1346, 0
          %v1353 = vsel %vm1348, %v1347, 0
          %1355 = vmatprep.subr.bf16.mxu0 0
          %1356 = vmatpush1.bf16.xpose.msra.mxu0 %v1353
          %1357 = vmatprep.subr.bf16.mxu0 0
          %1358 = vmatpush1.bf16.xpose.msra.mxu0 0
          %1359 = vmatprep.subr.bf16.mxu0 0
          %1360 = vmatpush1.bf16.xpose.msra.mxu0 0
          %1361 = vmatprep.subr.bf16.mxu0 0
          %1362 = vmatpush1.bf16.xpose.msra.mxu0 0
          %1363 = vmatprep.subr.bf16.mxu0 0
          %1364 = vmatpush1.bf16.xpose.msra.mxu0 0
          %1365 = vmatprep.subr.bf16.mxu0 0
          %1366 = vmatpush1.bf16.xpose.msra.mxu0 0
          %1367 = vmatprep.subr.bf16.mxu0 0
          %1368 = vmatpush1.bf16.xpose.msra.mxu0 0
          %1369 = vmatprep.subr.bf16.mxu0 0
          %1370 = vmatpush1.bf16.xpose.msra.mxu0 0
          %1371 = vmatprep.subr.bf16.mxu0 0
          %1372 = vmatpush1.bf16.xpose.msra.mxu0 0
          %1373 = vmatprep.subr.bf16.mxu0 0
          %1374 = vmatpush1.bf16.xpose.msra.mxu0 0
          %1375 = vmatprep.subr.bf16.mxu0 0
          %1376 = vmatpush1.bf16.xpose.msra.mxu0 0
          %1377 = vmatprep.subr.bf16.mxu0 0
          %1378 = vmatpush1.bf16.xpose.msra.mxu0 0
          %1379 = vmatprep.subr.bf16.mxu0 0
          %1380 = vmatpush1.bf16.xpose.msra.mxu0 0
          %1381 = vmatprep.subr.bf16.mxu0 0
          %1382 = vmatpush1.bf16.xpose.msra.mxu0 0
          %1383 = vmatprep.subr.bf16.mxu0 0
          %1384 = vmatpush1.bf16.xpose.msra.mxu0 0
          %1385 = vmatprep.subr.bf16.mxu0 0
          %1386 = vmatpush1.bf16.xpose.msra.mxu0 0
          %1387 = vmatprep.mubr.bf16.mxu0 0
          %1388 = vmatmul.mubr.bf16.gmra.mrb[0].mxu0 %v1350
          %v1389 = vpop.f32.mrb[0].mxu0
          %v1390 = vadd.f32 %v1129, %v1389
          %v1391 = vpop.f32.mrb[0].mxu0
          %v1392 = vpop.f32.mrb[0].mxu0
          %v1393 = vpop.f32.mrb[0].mxu0
          %1394 = vdwg.mxu0
          %vm1395 = vcmask 130048
          %v1396 = vsel %vm1395, %v1390, -inf
          %1397 = vmax.xlane.f32.xlu0 %v1396
          %v1398 = vpop.xlane.xlu0 %1397
          %v1399 = vsub.f32 %v1390, %v1398
          %v1400 = vmul.f32 %v1399, 1.442695
          %v1401 = vpow.pop %v1400
          %v1402 = vsel %vm1395, %v1401, 0.0
          %1403 = vadd.xlane.f32.xlu0 %v1402
          %v1404 = vpop.xlane.xlu0 %1403
          %v1405 = vrcp.pop %v1404
          %v1406 = vmul.f32 %v1401, %v1405
          %v1407 = vpack.c.bf16 %v1406, %v1406
          %v1408 = vpack.c.bf16 %v1343, %v1340
          %v1410 = vsel %vm1395, %v1407, 0
          %1412 = vmatprep.subr.bf16.mxu0 0
          %1413 = vmatpush1.bf16.msra.mxu0 %v1408
          %1414 = vmatprep.subr.bf16.mxu0 0
          %1415 = vmatpush1.bf16.msra.mxu0 0
          %1416 = vmatprep.subr.bf16.mxu0 0
          %1417 = vmatpush1.bf16.msra.mxu0 0
          %1418 = vmatprep.subr.bf16.mxu0 0
          %1419 = vmatpush1.bf16.msra.mxu0 0
          %1420 = vmatprep.subr.bf16.mxu0 0
          %1421 = vmatpush1.bf16.msra.mxu0 0
          %1422 = vmatprep.subr.bf16.mxu0 0
          %1423 = vmatpush1.bf16.msra.mxu0 0
          %1424 = vmatprep.subr.bf16.mxu0 0
          %1425 = vmatpush1.bf16.msra.mxu0 0
          %1426 = vmatprep.subr.bf16.mxu0 0
          %1427 = vmatpush1.bf16.msra.mxu0 0
          %1428 = vmatprep.subr.bf16.mxu0 0
          %1429 = vmatpush1.bf16.msra.mxu0 0
          %1430 = vmatprep.subr.bf16.mxu0 0
          %1431 = vmatpush1.bf16.msra.mxu0 0
          %1432 = vmatprep.subr.bf16.mxu0 0
          %1433 = vmatpush1.bf16.msra.mxu0 0
          %1434 = vmatprep.subr.bf16.mxu0 0
          %1435 = vmatpush1.bf16.msra.mxu0 0
          %1436 = vmatprep.subr.bf16.mxu0 0
          %1437 = vmatpush1.bf16.msra.mxu0 0
          %1438 = vmatprep.subr.bf16.mxu0 0
          %1439 = vmatpush1.bf16.msra.mxu0 0
          %1440 = vmatprep.subr.bf16.mxu0 0
          %1441 = vmatpush1.bf16.msra.mxu0 0
          %1442 = vmatprep.subr.bf16.mxu0 0
          %1443 = vmatpush1.bf16.msra.mxu0 0
          %1444 = vmatprep.mubr.bf16.mxu0 0
          %1445 = vmatmul.mubr.bf16.gmra.mrb[0].mxu0 %v1410
          %v1446 = vpop.f32.mrb[0].mxu0
          %v1447 = vadd.f32 0.0, %v1446
          %v1448 = vpop.f32.mrb[0].mxu0
          %v1449 = vpop.f32.mrb[0].mxu0
          %v1450 = vpop.f32.mrb[0].mxu0
          %1451 = vdwg.mxu0
          %s1452 = smul.u32 %s1133, 8
          %s1453 = scalar_lea.vmem [#allocation2], %s1452
          %1454 = vst.msk [vmem:[%s1453] sm:$0xff] %vm1348, %v1447
        $region217: #{tpu_custom_call.1} parent=115 // loop_footer
          %s1137 = sadd.s32 1, %s1133
        $region218: #{tpu_custom_call.1} parent=115 // loop_footer_branch
          %1132 = sbr.rel target = $region214
        $region219: #{tpu_custom_call.1} parent=115 // loop_exit
          _
        %v1455 = vld [vmem:[#allocation2] sm:$0xff]
        %s1456 = scalar_lea.vmem [#allocation2], 8
        %v1457 = vld [vmem:[%s1456] sm:$0xff]
        %s1458 = scalar_lea.vmem [#allocation2], 16
        %v1459 = vld [vmem:[%s1458] sm:$0xff]
        %s1460 = scalar_lea.vmem [#allocation2], 24
        %v1461 = vld [vmem:[%s1460] sm:$0xff]
        %1463 = vrot.lane.b32.xlu0 %v1457, 8
        %v1464 = vpop.permute.xlu0 %1463
        %1467 = vrot.lane.b32.xlu0 %v1459, 16
        %v1468 = vpop.permute.xlu0 %1467
        %1471 = vrot.lane.b32.xlu0 %v1461, 24
        %v1472 = vpop.permute.xlu0 %1471
        %vm1474 = vcmask 64512
        %v1475 = vsel %vm1474, %v1455, %v1464
        %vm1476 = vcmask 130048
        %v1477 = vsel %vm1476, %v1475, %v1468
        %vm1478 = vcmask 195584
        %v1479 = vsel %vm1478, %v1477, %v1472
        %v1480 = vpack.c.bf16 %v1479, %v1479
        %v1481 = vld [vmem:[#allocation17] sm:$0xf]
        %v1482 = vld [vmem:[#allocation17 + $0x4] sm:$0xf]
        %v1483 = vld [vmem:[#allocation17 + $0x8] sm:$0xf]
        %v1484 = vld [vmem:[#allocation17 + $0xc] sm:$0xf]
        %v1485 = vld [vmem:[#allocation18] sm:$0x1]
        %v1487 = vlaneseq
        %v1488 = vshrl.u32 %v1487, 7
        %v1489 = vsub.s32 0, %v1488
        %v1490 = vrot.slane %v1485, %v1489
        %v1496 = vunpack.c.l.b16 %v1481
        %v1497 = vunpack.c.l.b16 %v1482
        %v1498 = vunpack.c.l.b16 %v1483
        %v1499 = vunpack.c.l.b16 %v1484
        %v1500 = vpack.c.b16 %v1497, %v1496
        %v1501 = vpack.c.b16 %v1499, %v1498
        %vm1504 = vcmask 261120
        %v1506 = vsel %vm1504, %v1480, 0
        %1508 = vmatprep.subr.bf16.mxu0 0
        %1509 = vmatpush1.bf16.msra.mxu0 %v1500
        %1510 = vmatprep.subr.bf16.mxu0 0
        %1511 = vmatpush1.bf16.msra.mxu0 %v1501
        %1512 = vmatprep.subr.bf16.mxu0 0
        %1513 = vmatpush1.bf16.msra.mxu0 0
        %1514 = vmatprep.subr.bf16.mxu0 0
        %1515 = vmatpush1.bf16.msra.mxu0 0
        %1516 = vmatprep.subr.bf16.mxu0 0
        %1517 = vmatpush1.bf16.msra.mxu0 0
        %1518 = vmatprep.subr.bf16.mxu0 0
        %1519 = vmatpush1.bf16.msra.mxu0 0
        %1520 = vmatprep.subr.bf16.mxu0 0
        %1521 = vmatpush1.bf16.msra.mxu0 0
        %1522 = vmatprep.subr.bf16.mxu0 0
        %1523 = vmatpush1.bf16.msra.mxu0 0
        %1524 = vmatprep.subr.bf16.mxu0 0
        %1525 = vmatpush1.bf16.msra.mxu0 0
        %1526 = vmatprep.subr.bf16.mxu0 0
        %1527 = vmatpush1.bf16.msra.mxu0 0
        %1528 = vmatprep.subr.bf16.mxu0 0
        %1529 = vmatpush1.bf16.msra.mxu0 0
        %1530 = vmatprep.subr.bf16.mxu0 0
        %1531 = vmatpush1.bf16.msra.mxu0 0
        %1532 = vmatprep.subr.bf16.mxu0 0
        %1533 = vmatpush1.bf16.msra.mxu0 0
        %1534 = vmatprep.subr.bf16.mxu0 0
        %1535 = vmatpush1.bf16.msra.mxu0 0
        %1536 = vmatprep.subr.bf16.mxu0 0
        %1537 = vmatpush1.bf16.msra.mxu0 0
        %1538 = vmatprep.subr.bf16.mxu0 0
        %1539 = vmatpush1.bf16.msra.mxu0 0
        %1540 = vmatprep.mubr.bf16.mxu0 0
        %1541 = vmatmul.mubr.bf16.gmra.mrb[0].mxu0 %v1506
        %v1542 = vpop.f32.mrb[0].mxu0
        %v1543 = vadd.f32 %v1490, %v1542
        %v1544 = vpop.f32.mrb[0].mxu0
        %v1545 = vpop.f32.mrb[0].mxu0
        %v1546 = vpop.f32.mrb[0].mxu0
        %1547 = vdwg.mxu0
        %v1548 = vadd.f32 %v1119, %v1543
        %v1549 = vsel %vm1504, %v1548, 0.0
        %1550 = vadd.xlane.f32.xlu0 %v1549
        %v1551 = vpop.xlane.xlu0 %1550
        %v1552 = vrcp.pop 32.0
        %v1553 = vmul.f32 %v1551, %v1552
        %v1554 = vsub.f32 %v1548, %v1553
        %v1555 = vmul.f32 %v1554, %v1554
        %v1556 = vsel %vm1504, %v1555, 0.0
        %1557 = vadd.xlane.f32.xlu0 %v1556
        %v1558 = vpop.xlane.xlu0 %1557
        %v1559 = vmul.f32 %v1558, %v1552
        %v1560 = vadd.f32 %v1559, 1e-05
        %v1561 = vrsqrt.pop %v1560
        %v1562 = vmul.f32 %v1554, %v1561
        %v1564 = vlaneseq
        %v1565 = vshrl.u32 %v1564, 7
        %v1566 = vsub.s32 0, %v1565
        %v1567 = vrot.slane %v1120, %v1566
        %v1569 = vmul.f32 %v1562, %v1567
        %v1571 = vlaneseq
        %v1572 = vshrl.u32 %v1571, 7
        %v1573 = vsub.s32 0, %v1572
        %v1574 = vrot.slane %v1121, %v1573
        %v1576 = vadd.f32 %v1569, %v1574
        %v1577 = vld [vmem:[%s956] sm:$0xff]
        %v1578 = vpack.c.bf16 %v1576, %v1576
        %v1579 = vpack.c.bf16 %v1577, %v1577
        loop: start=0, step=1, limit=4
        $region220: #{tpu_custom_call.1} parent=115 // loop_pre_header
          _
        $region221: #{tpu_custom_call.1} parent=115 // loop_header
          %s1581 = sphi 0, %s1585
          %p1582 = scmp.ge.s32.totalorder %s1581, 4
        $region222: #{tpu_custom_call.1} parent=115 // loop_header_branch
          %1584 = sbr.rel (%p1582) target = $region226
        $region223: #{tpu_custom_call.1} parent=115 // loop_body
          %s1586 = smul.u32 %s1581, 4
          %s1587 = smul.addr %s1586, 4
          %s1588 = scalar_lea.vmem [#allocation20], %s1587
          %v1589 = vld [vmem:[%s1588] sm:$0xf]
          %v1590 = vld [vmem:[%s1588 + $0x4] sm:$0xf]
          %v1591 = vld [vmem:[%s1588 + $0x8] sm:$0xf]
          %v1592 = vld [vmem:[%s1588 + $0xc] sm:$0xf]
          %s1593 = scalar_lea.vmem [#allocation21], %s1581
          %v1594 = vld [vmem:[%s1593] sm:$0x1]
          %v1596 = vlaneseq
          %v1597 = vshrl.u32 %v1596, 7
          %v1598 = vsub.s32 0, %v1597
          %v1599 = vrot.slane %v1594, %v1598
          %v1605 = vunpack.c.l.b16 %v1589
          %v1606 = vunpack.c.l.b16 %v1590
          %v1607 = vunpack.c.l.b16 %v1591
          %v1608 = vunpack.c.l.b16 %v1592
          %v1609 = vpack.c.b16 %v1606, %v1605
          %v1610 = vpack.c.b16 %v1608, %v1607
          %v1614 = vsel %vm1504, %v1578, 0
          %1616 = vmatprep.subr.bf16.mxu0 0
          %1617 = vmatpush1.bf16.msra.mxu0 %v1609
          %1618 = vmatprep.subr.bf16.mxu0 0
          %1619 = vmatpush1.bf16.msra.mxu0 %v1610
          %1620 = vmatprep.subr.bf16.mxu0 0
          %1621 = vmatpush1.bf16.msra.mxu0 0
          %1622 = vmatprep.subr.bf16.mxu0 0
          %1623 = vmatpush1.bf16.msra.mxu0 0
          %1624 = vmatprep.subr.bf16.mxu0 0
          %1625 = vmatpush1.bf16.msra.mxu0 0
          %1626 = vmatprep.subr.bf16.mxu0 0
          %1627 = vmatpush1.bf16.msra.mxu0 0
          %1628 = vmatprep.subr.bf16.mxu0 0
          %1629 = vmatpush1.bf16.msra.mxu0 0
          %1630 = vmatprep.subr.bf16.mxu0 0
          %1631 = vmatpush1.bf16.msra.mxu0 0
          %1632 = vmatprep.subr.bf16.mxu0 0
          %1633 = vmatpush1.bf16.msra.mxu0 0
          %1634 = vmatprep.subr.bf16.mxu0 0
          %1635 = vmatpush1.bf16.msra.mxu0 0
          %1636 = vmatprep.subr.bf16.mxu0 0
          %1637 = vmatpush1.bf16.msra.mxu0 0
          %1638 = vmatprep.subr.bf16.mxu0 0
          %1639 = vmatpush1.bf16.msra.mxu0 0
          %1640 = vmatprep.subr.bf16.mxu0 0
          %1641 = vmatpush1.bf16.msra.mxu0 0
          %1642 = vmatprep.subr.bf16.mxu0 0
          %1643 = vmatpush1.bf16.msra.mxu0 0
          %1644 = vmatprep.subr.bf16.mxu0 0
          %1645 = vmatpush1.bf16.msra.mxu0 0
          %1646 = vmatprep.subr.bf16.mxu0 0
          %1647 = vmatpush1.bf16.msra.mxu0 0
          %1648 = vmatprep.mubr.bf16.mxu0 0
          %1649 = vmatmul.mubr.bf16.gmra.mrb[0].mxu0 %v1614
          %v1650 = vpop.f32.mrb[0].mxu0
          %v1651 = vadd.f32 %v1599, %v1650
          %v1652 = vpop.f32.mrb[0].mxu0
          %v1653 = vpop.f32.mrb[0].mxu0
          %v1654 = vpop.f32.mrb[0].mxu0
          %1655 = vdwg.mxu0
          %s1656 = smul.addr %s1586, 4
          %s1657 = scalar_lea.vmem [#allocation23], %s1656
          %v1658 = vld [vmem:[%s1657] sm:$0xf]
          %v1659 = vld [vmem:[%s1657 + $0x4] sm:$0xf]
          %v1660 = vld [vmem:[%s1657 + $0x8] sm:$0xf]
          %v1661 = vld [vmem:[%s1657 + $0xc] sm:$0xf]
          %s1662 = scalar_lea.vmem [#allocation24], %s1581
          %v1663 = vld [vmem:[%s1662] sm:$0x1]
          %v1665 = vlaneseq
          %v1666 = vshrl.u32 %v1665, 7
          %v1667 = vsub.s32 0, %v1666
          %v1668 = vrot.slane %v1663, %v1667
          %v1674 = vunpack.c.l.b16 %v1658
          %v1675 = vunpack.c.l.b16 %v1659
          %v1676 = vunpack.c.l.b16 %v1660
          %v1677 = vunpack.c.l.b16 %v1661
          %v1678 = vpack.c.b16 %v1675, %v1674
          %v1679 = vpack.c.b16 %v1677, %v1676
          %v1683 = vsel %vm1504, %v1579, 0
          %1685 = vmatprep.subr.bf16.mxu0 0
          %1686 = vmatpush1.bf16.msra.mxu0 %v1678
          %1687 = vmatprep.subr.bf16.mxu0 0
          %1688 = vmatpush1.bf16.msra.mxu0 %v1679
          %1689 = vmatprep.subr.bf16.mxu0 0
          %1690 = vmatpush1.bf16.msra.mxu0 0
          %1691 = vmatprep.subr.bf16.mxu0 0
          %1692 = vmatpush1.bf16.msra.mxu0 0
          %1693 = vmatprep.subr.bf16.mxu0 0
          %1694 = vmatpush1.bf16.msra.mxu0 0
          %1695 = vmatprep.subr.bf16.mxu0 0
          %1696 = vmatpush1.bf16.msra.mxu0 0
          %1697 = vmatprep.subr.bf16.mxu0 0
          %1698 = vmatpush1.bf16.msra.mxu0 0
          %1699 = vmatprep.subr.bf16.mxu0 0
          %1700 = vmatpush1.bf16.msra.mxu0 0
          %1701 = vmatprep.subr.bf16.mxu0 0
          %1702 = vmatpush1.bf16.msra.mxu0 0
          %1703 = vmatprep.subr.bf16.mxu0 0
          %1704 = vmatpush1.bf16.msra.mxu0 0
          %1705 = vmatprep.subr.bf16.mxu0 0
          %1706 = vmatpush1.bf16.msra.mxu0 0
          %1707 = vmatprep.subr.bf16.mxu0 0
          %1708 = vmatpush1.bf16.msra.mxu0 0
          %1709 = vmatprep.subr.bf16.mxu0 0
          %1710 = vmatpush1.bf16.msra.mxu0 0
          %1711 = vmatprep.subr.bf16.mxu0 0
          %1712 = vmatpush1.bf16.msra.mxu0 0
          %1713 = vmatprep.subr.bf16.mxu0 0
          %1714 = vmatpush1.bf16.msra.mxu0 0
          %1715 = vmatprep.subr.bf16.mxu0 0
          %1716 = vmatpush1.bf16.msra.mxu0 0
          %1717 = vmatprep.mubr.bf16.mxu0 0
          %1718 = vmatmul.mubr.bf16.gmra.mrb[0].mxu0 %v1683
          %v1719 = vpop.f32.mrb[0].mxu0
          %v1720 = vadd.f32 %v1668, %v1719
          %v1721 = vpop.f32.mrb[0].mxu0
          %v1722 = vpop.f32.mrb[0].mxu0
          %v1723 = vpop.f32.mrb[0].mxu0
          %1724 = vdwg.mxu0
          %s1725 = smul.addr %s1586, 4
          %s1726 = scalar_lea.vmem [#allocation26], %s1725
          %v1727 = vld [vmem:[%s1726] sm:$0xf]
          %v1728 = vld [vmem:[%s1726 + $0x4] sm:$0xf]
          %v1729 = vld [vmem:[%s1726 + $0x8] sm:$0xf]
          %v1730 = vld [vmem:[%s1726 + $0xc] sm:$0xf]
          %s1731 = scalar_lea.vmem [#allocation27], %s1581
          %v1732 = vld [vmem:[%s1731] sm:$0x1]
          %v1734 = vlaneseq
          %v1735 = vshrl.u32 %v1734, 7
          %v1736 = vsub.s32 0, %v1735
          %v1737 = vrot.slane %v1732, %v1736
          %v1743 = vunpack.c.l.b16 %v1727
          %v1744 = vunpack.c.l.b16 %v1728
          %v1745 = vunpack.c.l.b16 %v1729
          %v1746 = vunpack.c.l.b16 %v1730
          %v1747 = vpack.c.b16 %v1744, %v1743
          %v1748 = vpack.c.b16 %v1746, %v1745
          %1751 = vmatprep.subr.bf16.mxu0 0
          %1752 = vmatpush1.bf16.msra.mxu0 %v1747
          %1753 = vmatprep.subr.bf16.mxu0 0
          %1754 = vmatpush1.bf16.msra.mxu0 %v1748
          %1755 = vmatprep.subr.bf16.mxu0 0
          %1756 = vmatpush1.bf16.msra.mxu0 0
          %1757 = vmatprep.subr.bf16.mxu0 0
          %1758 = vmatpush1.bf16.msra.mxu0 0
          %1759 = vmatprep.subr.bf16.mxu0 0
          %1760 = vmatpush1.bf16.msra.mxu0 0
          %1761 = vmatprep.subr.bf16.mxu0 0
          %1762 = vmatpush1.bf16.msra.mxu0 0
          %1763 = vmatprep.subr.bf16.mxu0 0
          %1764 = vmatpush1.bf16.msra.mxu0 0
          %1765 = vmatprep.subr.bf16.mxu0 0
          %1766 = vmatpush1.bf16.msra.mxu0 0
          %1767 = vmatprep.subr.bf16.mxu0 0
          %1768 = vmatpush1.bf16.msra.mxu0 0
          %1769 = vmatprep.subr.bf16.mxu0 0
          %1770 = vmatpush1.bf16.msra.mxu0 0
          %1771 = vmatprep.subr.bf16.mxu0 0
          %1772 = vmatpush1.bf16.msra.mxu0 0
          %1773 = vmatprep.subr.bf16.mxu0 0
          %1774 = vmatpush1.bf16.msra.mxu0 0
          %1775 = vmatprep.subr.bf16.mxu0 0
          %1776 = vmatpush1.bf16.msra.mxu0 0
          %1777 = vmatprep.subr.bf16.mxu0 0
          %1778 = vmatpush1.bf16.msra.mxu0 0
          %1779 = vmatprep.subr.bf16.mxu0 0
          %1780 = vmatpush1.bf16.msra.mxu0 0
          %1781 = vmatprep.subr.bf16.mxu0 0
          %1782 = vmatpush1.bf16.msra.mxu0 0
          %1783 = vmatprep.mubr.bf16.mxu0 0
          %1784 = vmatmul.mubr.bf16.gmra.mrb[0].mxu0 %v1683
          %v1785 = vpop.f32.mrb[0].mxu0
          %v1786 = vadd.f32 %v1737, %v1785
          %v1787 = vpop.f32.mrb[0].mxu0
          %v1788 = vpop.f32.mrb[0].mxu0
          %v1789 = vpop.f32.mrb[0].mxu0
          %1790 = vdwg.mxu0
          %v1791 = vpack.c.bf16 %v1651, %v1651
          %v1792 = vpack.c.bf16 %v1720, %v1720
          %v1794 = vsel %vm1474, %v1791, 0
          %v1797 = vsel %vm1474, %v1792, 0
          %1799 = vmatprep.subr.bf16.mxu0 0
          %1800 = vmatpush1.bf16.xpose.msra.mxu0 %v1797
          %1801 = vmatprep.subr.bf16.mxu0 0
          %1802 = vmatpush1.bf16.xpose.msra.mxu0 0
          %1803 = vmatprep.subr.bf16.mxu0 0
          %1804 = vmatpush1.bf16.xpose.msra.mxu0 0
          %1805 = vmatprep.subr.bf16.mxu0 0
          %1806 = vmatpush1.bf16.xpose.msra.mxu0 0
          %1807 = vmatprep.subr.bf16.mxu0 0
          %1808 = vmatpush1.bf16.xpose.msra.mxu0 0
          %1809 = vmatprep.subr.bf16.mxu0 0
          %1810 = vmatpush1.bf16.xpose.msra.mxu0 0
          %1811 = vmatprep.subr.bf16.mxu0 0
          %1812 = vmatpush1.bf16.xpose.msra.mxu0 0
          %1813 = vmatprep.subr.bf16.mxu0 0
          %1814 = vmatpush1.bf16.xpose.msra.mxu0 0
          %1815 = vmatprep.subr.bf16.mxu0 0
          %1816 = vmatpush1.bf16.xpose.msra.mxu0 0
          %1817 = vmatprep.subr.bf16.mxu0 0
          %1818 = vmatpush1.bf16.xpose.msra.mxu0 0
          %1819 = vmatprep.subr.bf16.mxu0 0
          %1820 = vmatpush1.bf16.xpose.msra.mxu0 0
          %1821 = vmatprep.subr.bf16.mxu0 0
          %1822 = vmatpush1.bf16.xpose.msra.mxu0 0
          %1823 = vmatprep.subr.bf16.mxu0 0
          %1824 = vmatpush1.bf16.xpose.msra.mxu0 0
          %1825 = vmatprep.subr.bf16.mxu0 0
          %1826 = vmatpush1.bf16.xpose.msra.mxu0 0
          %1827 = vmatprep.subr.bf16.mxu0 0
          %1828 = vmatpush1.bf16.xpose.msra.mxu0 0
          %1829 = vmatprep.subr.bf16.mxu0 0
          %1830 = vmatpush1.bf16.xpose.msra.mxu0 0
          %1831 = vmatprep.mubr.bf16.mxu0 0
          %1832 = vmatmul.mubr.bf16.gmra.mrb[0].mxu0 %v1794
          %v1833 = vpop.f32.mrb[0].mxu0
          %v1834 = vadd.f32 0.0, %v1833
          %v1835 = vpop.f32.mrb[0].mxu0
          %v1836 = vpop.f32.mrb[0].mxu0
          %v1837 = vpop.f32.mrb[0].mxu0
          %1838 = vdwg.mxu0
          %v1839 = vsel %vm1474, %v1834, -inf
          %1840 = vmax.xlane.f32.xlu0 %v1839
          %v1841 = vpop.xlane.xlu0 %1840
          %v1842 = vsub.f32 %v1834, %v1841
          %v1843 = vmul.f32 %v1842, 1.442695
          %v1844 = vpow.pop %v1843
          %v1845 = vsel %vm1474, %v1844, 0.0
          %1846 = vadd.xlane.f32.xlu0 %v1845
          %v1847 = vpop.xlane.xlu0 %1846
          %v1848 = vrcp.pop %v1847
          %v1849 = vmul.f32 %v1844, %v1848
          %v1850 = vpack.c.bf16 %v1849, %v1849
          %v1851 = vpack.c.bf16 %v1786, %v1786
          %v1853 = vsel %vm1474, %v1850, 0
          %vm1855 = vcmask 1043456
          %v1857 = vsel %vm1855, %v1851, 0
          %1859 = vmatprep.subr.bf16.mxu0 0
          %1860 = vmatpush1.bf16.msra.mxu0 %v1857
          %1861 = vmatprep.subr.bf16.mxu0 0
          %1862 = vmatpush1.bf16.msra.mxu0 0
          %1863 = vmatprep.subr.bf16.mxu0 0
          %1864 = vmatpush1.bf16.msra.mxu0 0
          %1865 = vmatprep.subr.bf16.mxu0 0
          %1866 = vmatpush1.bf16.msra.mxu0 0
          %1867 = vmatprep.subr.bf16.mxu0 0
          %1868 = vmatpush1.bf16.msra.mxu0 0
          %1869 = vmatprep.subr.bf16.mxu0 0
          %1870 = vmatpush1.bf16.msra.mxu0 0
          %1871 = vmatprep.subr.bf16.mxu0 0
          %1872 = vmatpush1.bf16.msra.mxu0 0
          %1873 = vmatprep.subr.bf16.mxu0 0
          %1874 = vmatpush1.bf16.msra.mxu0 0
          %1875 = vmatprep.subr.bf16.mxu0 0
          %1876 = vmatpush1.bf16.msra.mxu0 0
          %1877 = vmatprep.subr.bf16.mxu0 0
          %1878 = vmatpush1.bf16.msra.mxu0 0
          %1879 = vmatprep.subr.bf16.mxu0 0
          %1880 = vmatpush1.bf16.msra.mxu0 0
          %1881 = vmatprep.subr.bf16.mxu0 0
          %1882 = vmatpush1.bf16.msra.mxu0 0
          %1883 = vmatprep.subr.bf16.mxu0 0
          %1884 = vmatpush1.bf16.msra.mxu0 0
          %1885 = vmatprep.subr.bf16.mxu0 0
          %1886 = vmatpush1.bf16.msra.mxu0 0
          %1887 = vmatprep.subr.bf16.mxu0 0
          %1888 = vmatpush1.bf16.msra.mxu0 0
          %1889 = vmatprep.subr.bf16.mxu0 0
          %1890 = vmatpush1.bf16.msra.mxu0 0
          %1891 = vmatprep.mubr.bf16.mxu0 0
          %1892 = vmatmul.mubr.bf16.gmra.mrb[0].mxu0 %v1853
          %v1893 = vpop.f32.mrb[0].mxu0
          %v1894 = vadd.f32 0.0, %v1893
          %v1895 = vpop.f32.mrb[0].mxu0
          %v1896 = vpop.f32.mrb[0].mxu0
          %v1897 = vpop.f32.mrb[0].mxu0
          %1898 = vdwg.mxu0
          %s1899 = smul.u32 %s1581, 8
          %s1900 = scalar_lea.vmem [#allocation2], %s1899
          %1901 = vst.msk [vmem:[%s1900] sm:$0xff] %vm1474, %v1894
        $region224: #{tpu_custom_call.1} parent=115 // loop_footer
          %s1585 = sadd.s32 1, %s1581
        $region225: #{tpu_custom_call.1} parent=115 // loop_footer_branch
          %1580 = sbr.rel target = $region221
        $region226: #{tpu_custom_call.1} parent=115 // loop_exit
          _
        %v1902 = vld [vmem:[#allocation2] sm:$0xff]
        %v1903 = vld [vmem:[%s1456] sm:$0xff]
        %v1904 = vld [vmem:[%s1458] sm:$0xff]
        %v1905 = vld [vmem:[%s1460] sm:$0xff]
        %1907 = vrot.lane.b32.xlu0 %v1903, 8
        %v1908 = vpop.permute.xlu0 %1907
        %1911 = vrot.lane.b32.xlu0 %v1904, 16
        %v1912 = vpop.permute.xlu0 %1911
        %1915 = vrot.lane.b32.xlu0 %v1905, 24
        %v1916 = vpop.permute.xlu0 %1915
        %v1918 = vsel %vm1474, %v1902, %v1908
        %v1919 = vsel %vm1476, %v1918, %v1912
        %v1920 = vsel %vm1478, %v1919, %v1916
        %v1921 = vpack.c.bf16 %v1920, %v1920
        %v1922 = vld [vmem:[#allocation29] sm:$0xf]
        %v1923 = vld [vmem:[#allocation29 + $0x4] sm:$0xf]
        %v1924 = vld [vmem:[#allocation29 + $0x8] sm:$0xf]
        %v1925 = vld [vmem:[#allocation29 + $0xc] sm:$0xf]
        %v1926 = vld [vmem:[#allocation30] sm:$0x1]
        %v1928 = vlaneseq
        %v1929 = vshrl.u32 %v1928, 7
        %v1930 = vsub.s32 0, %v1929
        %v1931 = vrot.slane %v1926, %v1930
        %v1937 = vunpack.c.l.b16 %v1922
        %v1938 = vunpack.c.l.b16 %v1923
        %v1939 = vunpack.c.l.b16 %v1924
        %v1940 = vunpack.c.l.b16 %v1925
        %v1941 = vpack.c.b16 %v1938, %v1937
        %v1942 = vpack.c.b16 %v1940, %v1939
        %v1946 = vsel %vm1504, %v1921, 0
        %1948 = vmatprep.subr.bf16.mxu0 0
        %1949 = vmatpush1.bf16.msra.mxu0 %v1941
        %1950 = vmatprep.subr.bf16.mxu0 0
        %1951 = vmatpush1.bf16.msra.mxu0 %v1942
        %1952 = vmatprep.subr.bf16.mxu0 0
        %1953 = vmatpush1.bf16.msra.mxu0 0
        %1954 = vmatprep.subr.bf16.mxu0 0
        %1955 = vmatpush1.bf16.msra.mxu0 0
        %1956 = vmatprep.subr.bf16.mxu0 0
        %1957 = vmatpush1.bf16.msra.mxu0 0
        %1958 = vmatprep.subr.bf16.mxu0 0
        %1959 = vmatpush1.bf16.msra.mxu0 0
        %1960 = vmatprep.subr.bf16.mxu0 0
        %1961 = vmatpush1.bf16.msra.mxu0 0
        %1962 = vmatprep.subr.bf16.mxu0 0
        %1963 = vmatpush1.bf16.msra.mxu0 0
        %1964 = vmatprep.subr.bf16.mxu0 0
        %1965 = vmatpush1.bf16.msra.mxu0 0
        %1966 = vmatprep.subr.bf16.mxu0 0
        %1967 = vmatpush1.bf16.msra.mxu0 0
        %1968 = vmatprep.subr.bf16.mxu0 0
        %1969 = vmatpush1.bf16.msra.mxu0 0
        %1970 = vmatprep.subr.bf16.mxu0 0
        %1971 = vmatpush1.bf16.msra.mxu0 0
        %1972 = vmatprep.subr.bf16.mxu0 0
        %1973 = vmatpush1.bf16.msra.mxu0 0
        %1974 = vmatprep.subr.bf16.mxu0 0
        %1975 = vmatpush1.bf16.msra.mxu0 0
        %1976 = vmatprep.subr.bf16.mxu0 0
        %1977 = vmatpush1.bf16.msra.mxu0 0
        %1978 = vmatprep.subr.bf16.mxu0 0
        %1979 = vmatpush1.bf16.msra.mxu0 0
        %1980 = vmatprep.mubr.bf16.mxu0 0
        %1981 = vmatmul.mubr.bf16.gmra.mrb[0].mxu0 %v1946
        %v1982 = vpop.f32.mrb[0].mxu0
        %v1983 = vadd.f32 %v1931, %v1982
        %v1984 = vpop.f32.mrb[0].mxu0
        %v1985 = vpop.f32.mrb[0].mxu0
        %v1986 = vpop.f32.mrb[0].mxu0
        %1987 = vdwg.mxu0
        %v1988 = vadd.f32 %v1576, %v1983
        %v1989 = vsel %vm1504, %v1988, 0.0
        %1990 = vadd.xlane.f32.xlu0 %v1989
        %v1991 = vpop.xlane.xlu0 %1990
        %v1992 = vmul.f32 %v1991, %v1552
        %v1993 = vsub.f32 %v1988, %v1992
        %v1994 = vmul.f32 %v1993, %v1993
        %v1995 = vsel %vm1504, %v1994, 0.0
        %1996 = vadd.xlane.f32.xlu0 %v1995
        %v1997 = vpop.xlane.xlu0 %1996
        %v1998 = vmul.f32 %v1997, %v1552
        %v1999 = vadd.f32 %v1998, 1e-05
        %v2000 = vrsqrt.pop %v1999
        %v2001 = vmul.f32 %v1993, %v2000
        %v2002 = vmul.f32 %v2001, %v1567
        %v2003 = vadd.f32 %v2002, %v1574
        %v2004 = vpack.c.bf16 %v2003, %v2003
        %v2005 = vld [vmem:[#allocation32] sm:$0xf]
        %v2006 = vld [vmem:[#allocation32 + $0x4] sm:$0xf]
        %v2007 = vld [vmem:[#allocation32 + $0x8] sm:$0xf]
        %v2008 = vld [vmem:[#allocation32 + $0xc] sm:$0xf]
        %v2009 = vld [vmem:[#allocation33] sm:$0x1]
        %v2011 = vlaneseq
        %v2012 = vshrl.u32 %v2011, 7
        %v2013 = vsub.s32 0, %v2012
        %v2014 = vrot.slane %v2009, %v2013
        %v2020 = vunpack.c.l.b16 %v2005
        %v2021 = vunpack.c.l.b16 %v2006
        %v2022 = vunpack.c.l.b16 %v2007
        %v2023 = vunpack.c.l.b16 %v2008
        %v2024 = vpack.c.b16 %v2021, %v2020
        %v2025 = vpack.c.b16 %v2023, %v2022
        %v2029 = vsel %vm1504, %v2004, 0
        %2031 = vmatprep.subr.bf16.mxu0 0
        %2032 = vmatpush1.bf16.msra.mxu0 %v2024
        %2033 = vmatprep.subr.bf16.mxu0 0
        %2034 = vmatpush1.bf16.msra.mxu0 %v2025
        %2035 = vmatprep.subr.bf16.mxu0 0
        %2036 = vmatpush1.bf16.msra.mxu0 0
        %2037 = vmatprep.subr.bf16.mxu0 0
        %2038 = vmatpush1.bf16.msra.mxu0 0
        %2039 = vmatprep.subr.bf16.mxu0 0
        %2040 = vmatpush1.bf16.msra.mxu0 0
        %2041 = vmatprep.subr.bf16.mxu0 0
        %2042 = vmatpush1.bf16.msra.mxu0 0
        %2043 = vmatprep.subr.bf16.mxu0 0
        %2044 = vmatpush1.bf16.msra.mxu0 0
        %2045 = vmatprep.subr.bf16.mxu0 0
        %2046 = vmatpush1.bf16.msra.mxu0 0
        %2047 = vmatprep.subr.bf16.mxu0 0
        %2048 = vmatpush1.bf16.msra.mxu0 0
        %2049 = vmatprep.subr.bf16.mxu0 0
        %2050 = vmatpush1.bf16.msra.mxu0 0
        %2051 = vmatprep.subr.bf16.mxu0 0
        %2052 = vmatpush1.bf16.msra.mxu0 0
        %2053 = vmatprep.subr.bf16.mxu0 0
        %2054 = vmatpush1.bf16.msra.mxu0 0
        %2055 = vmatprep.subr.bf16.mxu0 0
        %2056 = vmatpush1.bf16.msra.mxu0 0
        %2057 = vmatprep.subr.bf16.mxu0 0
        %2058 = vmatpush1.bf16.msra.mxu0 0
        %2059 = vmatprep.subr.bf16.mxu0 0
        %2060 = vmatpush1.bf16.msra.mxu0 0
        %2061 = vmatprep.subr.bf16.mxu0 0
        %2062 = vmatpush1.bf16.msra.mxu0 0
        %2063 = vmatprep.mubr.bf16.mxu0 0
        %2064 = vmatmul.mubr.bf16.gmra.mrb[0].mxu0 %v2029
        %v2065 = vpop.f32.mrb[0].mxu0
        %v2066 = vadd.f32 %v2014, %v2065
        %v2067 = vpop.f32.mrb[0].mxu0
        %v2068 = vpop.f32.mrb[0].mxu0
        %v2069 = vpop.f32.mrb[0].mxu0
        %2070 = vdwg.mxu0
        %v2071 = vmax.f32 %v2066, 0.0
        %v2072 = vpack.c.bf16 %v2071, %v2071
        %v2073 = vld [vmem:[#allocation35] sm:$0xf]
        %v2074 = vld [vmem:[#allocation35 + $0x4] sm:$0xf]
        %v2075 = vld [vmem:[#allocation35 + $0x8] sm:$0xf]
        %v2076 = vld [vmem:[#allocation35 + $0xc] sm:$0xf]
        %v2077 = vld [vmem:[#allocation35 + $0x10] sm:$0xf]
        %v2078 = vld [vmem:[#allocation35 + $0x14] sm:$0xf]
        %v2079 = vld [vmem:[#allocation35 + $0x18] sm:$0xf]
        %v2080 = vld [vmem:[#allocation35 + $0x1c] sm:$0xf]
        %v2081 = vld [vmem:[#allocation36] sm:$0x1]
        %v2083 = vlaneseq
        %v2084 = vshrl.u32 %v2083, 7
        %v2085 = vsub.s32 0, %v2084
        %v2086 = vrot.slane %v2081, %v2085
        %v2096 = vunpack.c.l.b16 %v2073
        %v2097 = vunpack.c.l.b16 %v2074
        %v2098 = vunpack.c.l.b16 %v2075
        %v2099 = vunpack.c.l.b16 %v2076
        %v2100 = vunpack.c.l.b16 %v2077
        %v2101 = vunpack.c.l.b16 %v2078
        %v2102 = vunpack.c.l.b16 %v2079
        %v2103 = vunpack.c.l.b16 %v2080
        %v2104 = vpack.c.b16 %v2097, %v2096
        %v2105 = vpack.c.b16 %v2099, %v2098
        %v2106 = vpack.c.b16 %v2101, %v2100
        %v2107 = vpack.c.b16 %v2103, %v2102
        %vm2112 = vcmask 523264
        %v2114 = vsel %vm2112, %v2072, 0
        %2116 = vmatprep.subr.bf16.mxu0 0
        %2117 = vmatpush1.bf16.msra.mxu0 %v2104
        %2118 = vmatprep.subr.bf16.mxu0 0
        %2119 = vmatpush1.bf16.msra.mxu0 %v2105
        %2120 = vmatprep.subr.bf16.mxu0 0
        %2121 = vmatpush1.bf16.msra.mxu0 %v2106
        %2122 = vmatprep.subr.bf16.mxu0 0
        %2123 = vmatpush1.bf16.msra.mxu0 %v2107
        %2124 = vmatprep.subr.bf16.mxu0 0
        %2125 = vmatpush1.bf16.msra.mxu0 0
        %2126 = vmatprep.subr.bf16.mxu0 0
        %2127 = vmatpush1.bf16.msra.mxu0 0
        %2128 = vmatprep.subr.bf16.mxu0 0
        %2129 = vmatpush1.bf16.msra.mxu0 0
        %2130 = vmatprep.subr.bf16.mxu0 0
        %2131 = vmatpush1.bf16.msra.mxu0 0
        %2132 = vmatprep.subr.bf16.mxu0 0
        %2133 = vmatpush1.bf16.msra.mxu0 0
        %2134 = vmatprep.subr.bf16.mxu0 0
        %2135 = vmatpush1.bf16.msra.mxu0 0
        %2136 = vmatprep.subr.bf16.mxu0 0
        %2137 = vmatpush1.bf16.msra.mxu0 0
        %2138 = vmatprep.subr.bf16.mxu0 0
        %2139 = vmatpush1.bf16.msra.mxu0 0
        %2140 = vmatprep.subr.bf16.mxu0 0
        %2141 = vmatpush1.bf16.msra.mxu0 0
        %2142 = vmatprep.subr.bf16.mxu0 0
        %2143 = vmatpush1.bf16.msra.mxu0 0
        %2144 = vmatprep.subr.bf16.mxu0 0
        %2145 = vmatpush1.bf16.msra.mxu0 0
        %2146 = vmatprep.subr.bf16.mxu0 0
        %2147 = vmatpush1.bf16.msra.mxu0 0
        %2148 = vmatprep.mubr.bf16.mxu0 0
        %2149 = vmatmul.mubr.bf16.gmra.mrb[0].mxu0 %v2114
        %v2150 = vpop.f32.mrb[0].mxu0
        %v2151 = vadd.f32 %v2086, %v2150
        %v2152 = vpop.f32.mrb[0].mxu0
        %v2153 = vpop.f32.mrb[0].mxu0
        %v2154 = vpop.f32.mrb[0].mxu0
        %2155 = vdwg.mxu0
        %v2156 = vadd.f32 %v2003, %v2151
        %v2157 = vsel %vm1504, %v2156, 0.0
        %2158 = vadd.xlane.f32.xlu0 %v2157
        %v2159 = vpop.xlane.xlu0 %2158
        %v2160 = vmul.f32 %v2159, %v1552
        %v2161 = vsub.f32 %v2156, %v2160
        %v2162 = vmul.f32 %v2161, %v2161
        %v2163 = vsel %vm1504, %v2162, 0.0
        %2164 = vadd.xlane.f32.xlu0 %v2163
        %v2165 = vpop.xlane.xlu0 %2164
        %v2166 = vmul.f32 %v2165, %v1552
        %v2167 = vadd.f32 %v2166, 1e-05
        %v2168 = vrsqrt.pop %v2167
        %v2169 = vmul.f32 %v2161, %v2168
        %v2170 = vmul.f32 %v2169, %v1567
        %v2171 = vadd.f32 %v2170, %v1574
        %2172 = vst.msk [vmem:[%s1113] sm:$0xff] %vm1504, %v2171
        %s2173 = sand.u32 %s591, 1
        %s2174 = scalar_lea.sflag [#allocation5], %s2173
        %s2175 = sand.u32 %s591, 1
        %s2176 = smul.addr %s2175, 8
        %s2177 = scalar_lea.vmem [#allocation41], %s2176
        // Predicated region
        $region227: #{tpu_custom_call.1} parent=115 // pred_check
          %p2178 = pneg %p601
        $region228: #{tpu_custom_call.1} parent=115 // pred_check_branch
          %2180 = sbr.rel (%p2178) target = $region230
        $region229: #{tpu_custom_call.1} parent=115 // pred_region
          %s2182 = ssub.s32 128, 128
          %2183 = vsyncadd %s2174, %s2182
          %s2184 = smul.addr %s59, 2
          %s2185 = sadd.s32 %s60, %s2184
          %s2186 = smul.addr %s2185, 128
          %s2187 = scalar_lea.hbm %s24, %s2186
          %s2189 = sshll.u32 %s2177, 4
          %s2190 = int_to_ptr.vmem [resolvable:$true] %s2189
          %2192 = dma.vmem_to_hbm [thread:$0]  %s2190, 128, %s2187, %s2174
        $region230: #{tpu_custom_call.1} parent=115 // pred_fallthru
          _
      $region116: #{tpu_custom_call.1} parent=5 // pred_fallthru
        _
      %p2193 = scmp.le.s32.totalorder 2, %s50
      // Predicated region
      $region231: #{tpu_custom_call.1} parent=5 // pred_check
        %p2194 = pneg %p2193
      $region232: #{tpu_custom_call.1} parent=5 // pred_check_branch
        %2196 = sbr.rel (%p2194) target = $region234
      $region233: #{tpu_custom_call.1} parent=5 // pred_region
        %s2197 = ssub.s32 %s50, 2
        // Predicated region
        $region235: #{tpu_custom_call.1} parent=233 // pred_check
          %p2198 = pneg %p607
        $region236: #{tpu_custom_call.1} parent=233 // pred_check_branch
          %2200 = sbr.rel (%p2198) target = $region238
        $region237: #{tpu_custom_call.1} parent=233 // pred_region
          %s2201 = sand.u32 %s592, 1
          %s2202 = scalar_lea.sflag [#allocation5], %s2201
          %s2203 = sand.u32 %s592, 1
          %s2204 = smul.addr %s2203, 8
          %s2205 = scalar_lea.vmem [#allocation41], %s2204
          %2206 = dma.done %s2202, 128
        $region238: #{tpu_custom_call.1} parent=233 // pred_fallthru
          _
      $region234: #{tpu_custom_call.1} parent=5 // pred_fallthru
        _
    $region6: #{tpu_custom_call.1} parent=1 // loop_footer
      %s54 = sadd.s32 1, %s50
    $region7: #{tpu_custom_call.1} parent=1 // loop_footer_branch
      %49 = sbr.rel target = $region3
    $region8: #{tpu_custom_call.1} parent=1 // loop_exit
      _
    %2207 = vsyncpa [#allocation4], 1
    %s2208 = scalar_lea.sflag [#allocation4], 1
    %2209 = vsyncpa %s2208, 1
    %2210 = vsyncpa [#allocation7], 1
    %s2211 = scalar_lea.sflag [#allocation7], 1
    %2212 = vsyncpa %s2211, 1
    %2213 = vsyncpa [#allocation10], 1
    %2214 = vsyncpa [#allocation13], 1
    %2215 = vsyncpa [#allocation16], 1
    %2216 = vsyncpa [#allocation19], 1
    %2217 = vsyncpa [#allocation22], 1
    %2218 = vsyncpa [#allocation25], 1
    %2219 = vsyncpa [#allocation28], 1
    %2220 = vsyncpa [#allocation31], 1
    %2221 = vsyncpa [#allocation34], 1
    %2222 = vsyncpa [#allocation37], 1
    %2223 = vsyncpa [#allocation40], 1
    %2224 = vsyncpa [#allocation5], 1
    %s2225 = scalar_lea.sflag [#allocation5], 1
    %2226 = vsyncpa %s2225, 1

</llo_original>
